<compile_context>
chip_gen: v7x
topology: tpu7x:2x2x1
jax: 0.10.0
libtpu: 0.0.40
codegen_flags: <defaults>
</compile_context>

<pallas_src>
import functools

import jax
import jax.numpy as jnp
from jax.experimental import pallas as pl
from jax.experimental.pallas import tpu as pltpu

NEG_INF = -1e30  # finite "masked" value: NaN-safe with padded / fully-masked rows


def attention_block_kernel(x_q_ref, x_kv_ref, w_q_ref, w_kv_ref, w_proj_ref,
                           w13_ref, w2_ref, g1_ref, g2_ref, o_ref,
                           q_scr, acc_scr, m_scr, l_scr, *, num_heads, eps):
    qi = pl.program_id(1)
    ki = pl.program_id(2)
    num_kv = pl.num_programs(2)

    tq = q_scr.shape[0]
    tk = x_kv_ref.shape[1]
    C = x_q_ref.shape[2]
    Dh = C // num_heads
    scale = 1.0 / (Dh ** 0.5)
    bf16 = jnp.bfloat16
    f32 = jnp.float32

    def rmsnorm(v, g):
        ms = jnp.mean(v * v, axis=-1, keepdims=True)
        return v * jax.lax.rsqrt(ms + eps) * g

    # ---- ki == 0: compute scaled query tile once, reset online-softmax state ----
    @pl.when(ki == 0)
    def _init():
        xq = x_q_ref[0].astype(f32)
        hq = rmsnorm(xq, g1_ref[0])
        q = jnp.dot(hq.astype(bf16), w_q_ref[...], preferred_element_type=f32)
        q_scr[...] = (q * scale).astype(bf16)          # fold 1/sqrt(Dh) into q
        acc_scr[...] = jnp.zeros_like(acc_scr)
        m_scr[...] = jnp.full_like(m_scr, NEG_INF)
        l_scr[...] = jnp.zeros_like(l_scr)

    # ---- online-softmax update for this KV tile (skip tiles fully above the diagonal) ----
    @pl.when(ki * tk <= qi * tq + (tq - 1))
    def _compute():
        xkv = x_kv_ref[0].astype(f32)
        hkv = rmsnorm(xkv, g1_ref[0])
        kv = jnp.dot(hkv.astype(bf16), w_kv_ref[...],
                     preferred_element_type=f32).astype(bf16)          # (tk, 2C): [K | V]

        row = qi * tq + jax.lax.broadcasted_iota(jnp.int32, (tq, tk), 0)
        col = ki * tk + jax.lax.broadcasted_iota(jnp.int32, (tq, tk), 1)
        causal = col <= row

        for h in range(num_heads):                                      # static lane slices, no XLU transposes
            hsl = slice(h * Dh, (h + 1) * Dh)
            q_h = q_scr[:, hsl]                                         # (tq, Dh) bf16, pre-scaled
            k_h = kv[:, hsl]                                            # (tk, Dh) bf16
            v_h = kv[:, C + h * Dh: C + (h + 1) * Dh]                   # (tk, Dh) bf16

            s = jax.lax.dot_general(q_h, k_h, (((1,), (1,)), ((), ())),
                                    preferred_element_type=f32)          # (tq, tk)
            s = jnp.where(causal, s, NEG_INF)

            m_prev = m_scr[:, h:h + 1]
            m_new = jnp.maximum(m_prev, jnp.max(s, axis=-1, keepdims=True))
            alpha = jnp.exp(m_prev - m_new)
            p = jnp.exp(s - m_new)
            l_scr[:, h:h + 1] = alpha * l_scr[:, h:h + 1] + jnp.sum(p, axis=-1, keepdims=True)
            pv = jnp.dot(p.astype(bf16), v_h, preferred_element_type=f32)
            acc_scr[:, hsl] = alpha * acc_scr[:, hsl] + pv
            m_scr[:, h:h + 1] = m_new

    # ---- ki == last: normalize, output projection, residual, FFN, residual ----
    @pl.when(ki == num_kv - 1)
    def _finalize():
        for h in range(num_heads):
            hsl = slice(h * Dh, (h + 1) * Dh)
            inv = pl.reciprocal(l_scr[:, h:h + 1], approx=True)
            acc_scr[:, hsl] = acc_scr[:, hsl] * inv
        attn = acc_scr[...].astype(bf16)                                 # (tq, C)
        y = jnp.dot(attn, w_proj_ref[...], preferred_element_type=f32)
        x_new = x_q_ref[0].astype(f32) + y

        h2 = rmsnorm(x_new, g2_ref[0])
        ab = jnp.dot(h2.astype(bf16), w13_ref[...], preferred_element_type=f32)  # (tq, 2C)
        a = ab[:, :C]
        b = ab[:, C:]
        gated = (a * jax.lax.logistic(a) * b).astype(bf16)               # SiLU(a) * b
        ff = jnp.dot(gated, w2_ref[...], preferred_element_type=f32)
        o_ref[0] = (x_new + ff).astype(o_ref.dtype)


def _choose_tile(T, pref):
    if T <= pref:
        return T
    for t in range(pref, 7, -8):
        if T % t == 0:
            return t
    return T


def _vmem_limit_bytes(tq, tk, C, num_heads):
    w = 2 * (C * C + 2 * C * C + C * C + 2 * C * C + C * C)      # resident bf16 weights
    g = 2 * C * 4
    io = 2 * (tq * C + tk * C + tq * C) * 4                      # double-buffered f32 x_q / x_kv / out
    scratch = tq * C * 2 + tq * C * 4 + 2 * tq * max(num_heads, 8) * 4
    need = w + g + io + scratch
    return int(min(max(2 * need + (4 << 20), 32 << 20), 64 << 20))


def attention_block(x, params, *, num_heads, eps=1e-6, q_tile=256, kv_tile=256):
    B, T, C = x.shape
    assert C % num_heads == 0
    tq = _choose_tile(T, q_tile)   # 256 saturates v6e/v7x MXU; 128 is enough on v5e
    tk = _choose_tile(T, kv_tile)

    bf16 = jnp.bfloat16
    w_attn = params['w_attn']
    w_q = w_attn[:, :C].astype(bf16)
    w_kv = w_attn[:, C:].astype(bf16)
    w_proj = params['w_proj'].astype(bf16)
    w13 = jnp.concatenate([params['w1'], params['w3']], axis=1).astype(bf16)
    w2 = params['w2'].astype(bf16)
    g1 = params['g1'].astype(jnp.float32)
    g2 = params['g2'].astype(jnp.float32)

    kernel = functools.partial(attention_block_kernel, num_heads=num_heads, eps=eps)

    grid_spec = pltpu.PrefetchScalarGridSpec(
        num_scalar_prefetch=0,
        grid=(B, T // tq, T // tk),
        in_specs=[
            pl.BlockSpec((1, tq, C), lambda b, qi, ki: (b, qi, 0)),   # x (query rows)
            pl.BlockSpec((1, tk, C), lambda b, qi, ki: (b, ki, 0)),   # x (key/value rows)
            pl.BlockSpec((C, C), lambda b, qi, ki: (0, 0)),           # W_q      (bf16, resident)
            pl.BlockSpec((C, 2 * C), lambda b, qi, ki: (0, 0)),       # W_k|W_v  (bf16, resident)
            pl.BlockSpec((C, C), lambda b, qi, ki: (0, 0)),           # W_proj
            pl.BlockSpec((C, 2 * C), lambda b, qi, ki: (0, 0)),       # W1|W3
            pl.BlockSpec((C, C), lambda b, qi, ki: (0, 0)),           # W2
            pl.BlockSpec((1, C), lambda b, qi, ki: (0, 0)),           # RMSNorm1 gain
            pl.BlockSpec((1, C), lambda b, qi, ki: (0, 0)),           # RMSNorm2 gain
        ],
        out_specs=pl.BlockSpec((1, tq, C), lambda b, qi, ki: (b, qi, 0)),
        scratch_shapes=[
            pltpu.VMEM((tq, C), jnp.bfloat16),          # scaled query tile (MXU operand)
            pltpu.VMEM((tq, C), jnp.float32),           # attention accumulator
            pltpu.VMEM((tq, num_heads), jnp.float32),   # running max per head
            pltpu.VMEM((tq, num_heads), jnp.float32),   # running denominator per head
        ],
    )

    return pl.pallas_call(
        kernel,
        out_shape=jax.ShapeDtypeStruct((B, T, C), x.dtype),
        grid_spec=grid_spec,
        compiler_params=pltpu.CompilerParams(
            dimension_semantics=("parallel", "parallel", "arbitrary"),
            vmem_limit_bytes=_vmem_limit_bytes(tq, tk, C, num_heads),
        ),
    )(x, x, w_q, w_kv, w_proj, w13, w2, g1, g2)


def reference(x, params, num_heads, eps=1e-6):
    B, T, C = x.shape
    Dh = C // num_heads

    def rmsnorm(v, g):
        ms = jnp.mean(v * v, axis=-1, keepdims=True)
        return v * jax.lax.rsqrt(ms + eps) * g

    h = rmsnorm(x, params['g1'][0])
    qkv = h @ params['w_attn']
    q, k, v = jnp.split(qkv, 3, axis=-1)
    q = q.reshape(B, T, num_heads, Dh).transpose(0, 2, 1, 3)
    k = k.reshape(B, T, num_heads, Dh).transpose(0, 2, 1, 3)
    v = v.reshape(B, T, num_heads, Dh).transpose(0, 2, 1, 3)
    scores = jnp.einsum('bhtd,bhsd->bhts', q, k) / (Dh ** 0.5)
    mask = jnp.tril(jnp.ones((T, T), bool))
    scores = jnp.where(mask[None, None], scores, -jnp.inf)
    p = jax.nn.softmax(scores, axis=-1)
    attn = jnp.einsum('bhts,bhsd->bhtd', p, v).transpose(0, 2, 1, 3).reshape(B, T, C)
    x = x + attn @ params['w_proj']
    h2 = rmsnorm(x, params['g2'][0])
    ff = (jax.nn.silu(h2 @ params['w1']) * (h2 @ params['w3'])) @ params['w2']
    return x + ff


if __name__ == "__main__":
    B, T, C, H = 2, 8, 32, 4
    key = jax.random.PRNGKey(0)
    ks = jax.random.split(key, 6)
    scale = 0.05
    params = {
        'w_attn': jax.random.normal(ks[0], (C, 3 * C), jnp.float32) * scale,
        'w_proj': jax.random.normal(ks[1], (C, C), jnp.float32) * scale,
        'w1': jax.random.normal(ks[2], (C, C), jnp.float32) * scale,
        'w2': jax.random.normal(ks[3], (C, C), jnp.float32) * scale,
        'w3': jax.random.normal(ks[4], (C, C), jnp.float32) * scale,
        'g1': jnp.ones((1, C), jnp.float32),   # RMSNorm weight init = ones
        'g2': jnp.ones((1, C), jnp.float32),
    }
    x = jax.random.normal(ks[5], (B, T, C), jnp.float32)

    out = attention_block(x, params, num_heads=H)
    out = jax.block_until_ready(out)

    ref = reference(x, params, H)
    assert out.shape == (B, T, C)
    # bf16 MXU operands with fp32 accumulation -> ~1e-2 level agreement vs fp32 reference.
    assert jnp.allclose(out, ref, rtol=2e-2, atol=2e-2), float(jnp.max(jnp.abs(out - ref)))
    print("KERNEL_OK")
</pallas_src>

<mosaic_0001>
module attributes {stable_mosaic.version = 11 : i64} {
  func.func @attention_block_kernel(%arg0: i32, %arg1: i32, %arg2: i32, %arg3: memref<1x8x32xf32, #tpu.memory_space<vmem>>, %arg4: memref<1x8x32xf32, #tpu.memory_space<vmem>>, %arg5: memref<32x32xbf16, #tpu.memory_space<vmem>>, %arg6: memref<32x64xbf16, #tpu.memory_space<vmem>>, %arg7: memref<32x32xbf16, #tpu.memory_space<vmem>>, %arg8: memref<32x64xbf16, #tpu.memory_space<vmem>>, %arg9: memref<32x32xbf16, #tpu.memory_space<vmem>>, %arg10: memref<1x32xf32, #tpu.memory_space<vmem>>, %arg11: memref<1x32xf32, #tpu.memory_space<vmem>>, %arg12: memref<1x8x32xf32, #tpu.memory_space<vmem>>, %arg13: memref<8x32xbf16, #tpu.memory_space<vmem>>, %arg14: memref<8x32xf32, #tpu.memory_space<vmem>>, %arg15: memref<8x4xf32, #tpu.memory_space<vmem>>, %arg16: memref<8x4xf32, #tpu.memory_space<vmem>>) attributes {dimension_semantics = [#tpu.dimension_semantics<parallel>, #tpu.dimension_semantics<parallel>, #tpu.dimension_semantics<arbitrary>], iteration_bounds = array<i64: 2, 1, 1>, scalar_prefetch = 0 : i64, scratch_operands = 4 : i64, tpu.core_type = #tpu.core_type<tc>, window_params = [{transform_indices = @transform_0, window_bounds = array<i64: 1, 8, 32>}, {transform_indices = @transform_1, window_bounds = array<i64: 1, 8, 32>}, {pipeline_mode = #tpu.pipeline_mode<synchronous>, transform_indices = @transform_2, window_bounds = array<i64: 32, 32>}, {pipeline_mode = #tpu.pipeline_mode<synchronous>, transform_indices = @transform_3, window_bounds = array<i64: 32, 64>}, {pipeline_mode = #tpu.pipeline_mode<synchronous>, transform_indices = @transform_4, window_bounds = array<i64: 32, 32>}, {pipeline_mode = #tpu.pipeline_mode<synchronous>, transform_indices = @transform_5, window_bounds = array<i64: 32, 64>}, {pipeline_mode = #tpu.pipeline_mode<synchronous>, transform_indices = @transform_6, window_bounds = array<i64: 32, 32>}, {pipeline_mode = #tpu.pipeline_mode<synchronous>, transform_indices = @transform_7, window_bounds = array<i64: 1, 32>}, {pipeline_mode = #tpu.pipeline_mode<synchronous>, transform_indices = @transform_8, window_bounds = array<i64: 1, 32>}, {transform_indices = @transform_9, window_bounds = array<i64: 1, 8, 32>}]} {
    %c0_i32 = arith.constant 0 : i32
    %0 = arith.cmpi eq, %arg2, %c0_i32 : i32
    %1 = arith.extui %0 : i1 to i32
    %c0_i32_0 = arith.constant 0 : i32
    %2 = arith.cmpi ne, %1, %c0_i32_0 : i32
    scf.if %2 {
      %c0 = arith.constant 0 : index
      %c0_5 = arith.constant 0 : index
      %c0_6 = arith.constant 0 : index
      %12 = vector.load %arg3[%c0, %c0_5, %c0_6] : memref<1x8x32xf32, #tpu.memory_space<vmem>>, vector<1x8x32xf32>
      %13 = vector.shape_cast %12 : vector<1x8x32xf32> to vector<8x32xf32>
      %c0_7 = arith.constant 0 : index
      %c0_8 = arith.constant 0 : index
      %14 = vector.load %arg10[%c0_7, %c0_8] : memref<1x32xf32, #tpu.memory_space<vmem>>, vector<1x32xf32>
      %15 = vector.shape_cast %14 : vector<1x32xf32> to vector<32xf32>
      %16 = arith.mulf %13, %13 : vector<8x32xf32>
      %cst = arith.constant dense<0.000000e+00> : vector<8xf32>
      %17 = vector.multi_reduction <add>, %16, %cst [1] : vector<8x32xf32> to vector<8xf32>
      %18 = vector.shape_cast %17 : vector<8xf32> to vector<8x1xf32>
      %cst_9 = arith.constant 3.200000e+01 : f32
      %19 = vector.broadcast %cst_9 : f32 to vector<8x1xf32>
      %20 = arith.divf %18, %19 : vector<8x1xf32>
      %cst_10 = arith.constant 9.99999997E-7 : f32
      %21 = vector.broadcast %cst_10 : f32 to vector<8x1xf32>
      %22 = arith.addf %20, %21 : vector<8x1xf32>
      %23 = math.rsqrt %22 : vector<8x1xf32>
      %24 = vector.broadcast %23 : vector<8x1xf32> to vector<8x32xf32>
      %25 = arith.mulf %13, %24 : vector<8x32xf32>
      %26 = vector.shape_cast %15 : vector<32xf32> to vector<1x32xf32>
      %27 = vector.broadcast %26 : vector<1x32xf32> to vector<8x32xf32>
      %28 = arith.mulf %25, %27 : vector<8x32xf32>
      %29 = arith.truncf %28 : vector<8x32xf32> to vector<8x32xbf16>
      %c0_11 = arith.constant 0 : index
      %c0_12 = arith.constant 0 : index
      %30 = vector.load %arg5[%c0_11, %c0_12] : memref<32x32xbf16, #tpu.memory_space<vmem>>, vector<32x32xbf16>
      %cst_13 = arith.constant dense<0.000000e+00> : vector<8x32xf32>
      %31 = tpu.matmul %29, %30, %cst_13 {dimension_numbers = #tpu.dot_dimension_numbers<[1], [0], [0], [1], [0, 0, 1, 1], [], []>} : vector<8x32xbf16>, vector<32x32xbf16>, vector<8x32xf32> -> vector<8x32xf32>
      %cst_14 = arith.constant 0.353553385 : f32
      %32 = vector.broadcast %cst_14 : f32 to vector<8x32xf32>
      %33 = arith.mulf %31, %32 : vector<8x32xf32>
      %34 = arith.truncf %33 : vector<8x32xf32> to vector<8x32xbf16>
      %c0_15 = arith.constant 0 : index
      %c0_16 = arith.constant 0 : index
      %35 = vector.load %arg13[%c0_15, %c0_16] : memref<8x32xbf16, #tpu.memory_space<vmem>>, vector<8x32xbf16>
      tpu.vector_store %arg13[%c0_15, %c0_16], %34 {strides = array<i32>} : memref<8x32xbf16, #tpu.memory_space<vmem>>, vector<8x32xbf16>,
      %cst_17 = arith.constant 0.000000e+00 : f32
      %36 = vector.broadcast %cst_17 : f32 to vector<8x32xf32>
      %c0_18 = arith.constant 0 : index
      %c0_19 = arith.constant 0 : index
      %37 = vector.load %arg14[%c0_18, %c0_19] : memref<8x32xf32, #tpu.memory_space<vmem>>, vector<8x32xf32>
      tpu.vector_store %arg14[%c0_18, %c0_19], %36 {strides = array<i32>} : memref<8x32xf32, #tpu.memory_space<vmem>>, vector<8x32xf32>,
      %cst_20 = arith.constant -1.000000e+30 : f32
      %38 = vector.broadcast %cst_20 : f32 to vector<8x4xf32>
      %c0_21 = arith.constant 0 : index
      %c0_22 = arith.constant 0 : index
      %39 = vector.load %arg15[%c0_21, %c0_22] : memref<8x4xf32, #tpu.memory_space<vmem>>, vector<8x4xf32>
      tpu.vector_store %arg15[%c0_21, %c0_22], %38 {strides = array<i32>} : memref<8x4xf32, #tpu.memory_space<vmem>>, vector<8x4xf32>,
      %cst_23 = arith.constant 0.000000e+00 : f32
      %40 = vector.broadcast %cst_23 : f32 to vector<8x4xf32>
      %c0_24 = arith.constant 0 : index
      %c0_25 = arith.constant 0 : index
      %41 = vector.load %arg16[%c0_24, %c0_25] : memref<8x4xf32, #tpu.memory_space<vmem>>, vector<8x4xf32>
      tpu.vector_store %arg16[%c0_24, %c0_25], %40 {strides = array<i32>} : memref<8x4xf32, #tpu.memory_space<vmem>>, vector<8x4xf32>,
    } else {
    }
    %c8_i32 = arith.constant 8 : i32
    %3 = arith.muli %arg2, %c8_i32 : i32
    %c8_i32_1 = arith.constant 8 : i32
    %4 = arith.muli %arg1, %c8_i32_1 : i32
    %c7_i32 = arith.constant 7 : i32
    %5 = arith.addi %4, %c7_i32 : i32
    %6 = arith.cmpi sle, %3, %5 : i32
    %7 = arith.extui %6 : i1 to i32
    %c0_i32_2 = arith.constant 0 : i32
    %8 = arith.cmpi ne, %7, %c0_i32_2 : i32
    scf.if %8 {
      %c0 = arith.constant 0 : index
      %c0_5 = arith.constant 0 : index
      %c0_6 = arith.constant 0 : index
      %12 = vector.load %arg4[%c0, %c0_5, %c0_6] : memref<1x8x32xf32, #tpu.memory_space<vmem>>, vector<1x8x32xf32>
      %13 = vector.shape_cast %12 : vector<1x8x32xf32> to vector<8x32xf32>
      %c0_7 = arith.constant 0 : index
      %c0_8 = arith.constant 0 : index
      %14 = vector.load %arg10[%c0_7, %c0_8] : memref<1x32xf32, #tpu.memory_space<vmem>>, vector<1x32xf32>
      %15 = vector.shape_cast %14 : vector<1x32xf32> to vector<32xf32>
      %16 = arith.mulf %13, %13 : vector<8x32xf32>
      %cst = arith.constant dense<0.000000e+00> : vector<8xf32>
      %17 = vector.multi_reduction <add>, %16, %cst [1] : vector<8x32xf32> to vector<8xf32>
      %18 = vector.shape_cast %17 : vector<8xf32> to vector<8x1xf32>
      %cst_9 = arith.constant 3.200000e+01 : f32
      %19 = vector.broadcast %cst_9 : f32 to vector<8x1xf32>
      %20 = arith.divf %18, %19 : vector<8x1xf32>
      %cst_10 = arith.constant 9.99999997E-7 : f32
      %21 = vector.broadcast %cst_10 : f32 to vector<8x1xf32>
      %22 = arith.addf %20, %21 : vector<8x1xf32>
      %23 = math.rsqrt %22 : vector<8x1xf32>
      %24 = vector.broadcast %23 : vector<8x1xf32> to vector<8x32xf32>
      %25 = arith.mulf %13, %24 : vector<8x32xf32>
      %26 = vector.shape_cast %15 : vector<32xf32> to vector<1x32xf32>
      %27 = vector.broadcast %26 : vector<1x32xf32> to vector<8x32xf32>
      %28 = arith.mulf %25, %27 : vector<8x32xf32>
      %29 = arith.truncf %28 : vector<8x32xf32> to vector<8x32xbf16>
      %c0_11 = arith.constant 0 : index
      %c0_12 = arith.constant 0 : index
      %30 = vector.load %arg6[%c0_11, %c0_12] : memref<32x64xbf16, #tpu.memory_space<vmem>>, vector<32x64xbf16>
      %cst_13 = arith.constant dense<0.000000e+00> : vector<8x64xf32>
      %31 = tpu.matmul %29, %30, %cst_13 {dimension_numbers = #tpu.dot_dimension_numbers<[1], [0], [0], [1], [0, 0, 1, 1], [], []>} : vector<8x32xbf16>, vector<32x64xbf16>, vector<8x64xf32> -> vector<8x64xf32>
      %32 = arith.truncf %31 : vector<8x64xf32> to vector<8x64xbf16>
      %c8_i32_14 = arith.constant 8 : i32
      %33 = arith.muli %arg1, %c8_i32_14 : i32
      %34 = tpu.iota {dimensions = array<i32: 0>} : vector<8x8xi32>
      %35 = vector.broadcast %33 : i32 to vector<8x8xi32>
      %36 = arith.addi %35, %34 : vector<8x8xi32>
      %c8_i32_15 = arith.constant 8 : i32
      %37 = arith.muli %arg2, %c8_i32_15 : i32
      %38 = tpu.iota {dimensions = array<i32: 1>} : vector<8x8xi32>
      %39 = vector.broadcast %37 : i32 to vector<8x8xi32>
      %40 = arith.addi %39, %38 : vector<8x8xi32>
      %41 = arith.cmpi sle, %40, %36 : vector<8x8xi32>
      %c0_16 = arith.constant 0 : index
      %c0_17 = arith.constant 0 : index
      %42 = vector.load %arg13[%c0_16, %c0_17] : memref<8x32xbf16, #tpu.memory_space<vmem>>, vector<8x8xbf16>
      %43 = vector.extract_strided_slice %32 {offsets = [0, 0], sizes = [8, 8], strides = [1, 1]} : vector<8x64xbf16> to vector<8x8xbf16>
      %44 = vector.extract_strided_slice %32 {offsets = [0, 32], sizes = [8, 8], strides = [1, 1]} : vector<8x64xbf16> to vector<8x8xbf16>
      %cst_18 = arith.constant dense<0.000000e+00> : vector<8x8xf32>
      %45 = tpu.matmul %42, %43, %cst_18 {dimension_numbers = #tpu.dot_dimension_numbers<[1], [1], [0], [0], [0, 0, 1, 0], [], []>} : vector<8x8xbf16>, vector<8x8xbf16>, vector<8x8xf32> -> vector<8x8xf32>
      %cst_19 = arith.constant -1.000000e+30 : f32
      %46 = vector.broadcast %cst_19 : f32 to vector<8x8xf32>
      %47 = arith.select %41, %45, %46 : vector<8x8xi1>, vector<8x8xf32>
      %c0_20 = arith.constant 0 : index
      %c0_21 = arith.constant 0 : index
      %48 = vector.load %arg15[%c0_20, %c0_21] : memref<8x4xf32, #tpu.memory_space<vmem>>, vector<8x1xf32>
      %cst_22 = arith.constant dense<0xFF800000> : vector<8xf32>
      %49 = vector.multi_reduction <maximumf>, %47, %cst_22 [1] : vector<8x8xf32> to vector<8xf32>
      %50 = vector.shape_cast %49 : vector<8xf32> to vector<8x1xf32>
      %51 = arith.maximumf %48, %50 : vector<8x1xf32>
      %52 = arith.subf %48, %51 : vector<8x1xf32>
      %53 = math.exp %52 : vector<8x1xf32>
      %54 = vector.broadcast %51 : vector<8x1xf32> to vector<8x8xf32>
      %55 = arith.subf %47, %54 : vector<8x8xf32>
      %56 = math.exp %55 : vector<8x8xf32>
      %c0_23 = arith.constant 0 : index
      %c0_24 = arith.constant 0 : index
      %57 = vector.load %arg16[%c0_23, %c0_24] : memref<8x4xf32, #tpu.memory_space<vmem>>, vector<8x1xf32>
      %58 = arith.mulf %53, %57 : vector<8x1xf32>
      %cst_25 = arith.constant dense<0.000000e+00> : vector<8xf32>
      %59 = vector.multi_reduction <add>, %56, %cst_25 [1] : vector<8x8xf32> to vector<8xf32>
      %60 = vector.shape_cast %59 : vector<8xf32> to vector<8x1xf32>
      %61 = arith.addf %58, %60 : vector<8x1xf32>
      %c0_26 = arith.constant 0 : index
      %c0_27 = arith.constant 0 : index
      %62 = vector.load %arg16[%c0_26, %c0_27] : memref<8x4xf32, #tpu.memory_space<vmem>>, vector<8x1xf32>
      tpu.vector_store %arg16[%c0_26, %c0_27], %61 {strides = array<i32>} : memref<8x4xf32, #tpu.memory_space<vmem>>, vector<8x1xf32>,
      %63 = arith.truncf %56 : vector<8x8xf32> to vector<8x8xbf16>
      %cst_28 = arith.constant dense<0.000000e+00> : vector<8x8xf32>
      %64 = tpu.matmul %63, %44, %cst_28 {dimension_numbers = #tpu.dot_dimension_numbers<[1], [0], [0], [1], [0, 0, 1, 1], [], []>} : vector<8x8xbf16>, vector<8x8xbf16>, vector<8x8xf32> -> vector<8x8xf32>
      %c0_29 = arith.constant 0 : index
      %c0_30 = arith.constant 0 : index
      %65 = vector.load %arg14[%c0_29, %c0_30] : memref<8x32xf32, #tpu.memory_space<vmem>>, vector<8x8xf32>
      %66 = vector.broadcast %53 : vector<8x1xf32> to vector<8x8xf32>
      %67 = arith.mulf %66, %65 : vector<8x8xf32>
      %68 = arith.addf %67, %64 : vector<8x8xf32>
      %c0_31 = arith.constant 0 : index
      %c0_32 = arith.constant 0 : index
      %69 = vector.load %arg14[%c0_31, %c0_32] : memref<8x32xf32, #tpu.memory_space<vmem>>, vector<8x8xf32>
      tpu.vector_store %arg14[%c0_31, %c0_32], %68 {strides = array<i32>} : memref<8x32xf32, #tpu.memory_space<vmem>>, vector<8x8xf32>,
      %c0_33 = arith.constant 0 : index
      %c0_34 = arith.constant 0 : index
      %70 = vector.load %arg15[%c0_33, %c0_34] : memref<8x4xf32, #tpu.memory_space<vmem>>, vector<8x1xf32>
      tpu.vector_store %arg15[%c0_33, %c0_34], %51 {strides = array<i32>} : memref<8x4xf32, #tpu.memory_space<vmem>>, vector<8x1xf32>,
      %c0_35 = arith.constant 0 : index
      %c8 = arith.constant 8 : index
      %71 = vector.load %arg13[%c0_35, %c8] : memref<8x32xbf16, #tpu.memory_space<vmem>>, vector<8x8xbf16>
      %72 = vector.extract_strided_slice %32 {offsets = [0, 8], sizes = [8, 8], strides = [1, 1]} : vector<8x64xbf16> to vector<8x8xbf16>
      %73 = vector.extract_strided_slice %32 {offsets = [0, 40], sizes = [8, 8], strides = [1, 1]} : vector<8x64xbf16> to vector<8x8xbf16>
      %cst_36 = arith.constant dense<0.000000e+00> : vector<8x8xf32>
      %74 = tpu.matmul %71, %72, %cst_36 {dimension_numbers = #tpu.dot_dimension_numbers<[1], [1], [0], [0], [0, 0, 1, 0], [], []>} : vector<8x8xbf16>, vector<8x8xbf16>, vector<8x8xf32> -> vector<8x8xf32>
      %cst_37 = arith.constant -1.000000e+30 : f32
      %75 = vector.broadcast %cst_37 : f32 to vector<8x8xf32>
      %76 = arith.select %41, %74, %75 : vector<8x8xi1>, vector<8x8xf32>
      %c0_38 = arith.constant 0 : index
      %c1 = arith.constant 1 : index
      %77 = vector.load %arg15[%c0_38, %c1] : memref<8x4xf32, #tpu.memory_space<vmem>>, vector<8x1xf32>
      %cst_39 = arith.constant dense<0xFF800000> : vector<8xf32>
      %78 = vector.multi_reduction <maximumf>, %76, %cst_39 [1] : vector<8x8xf32> to vector<8xf32>
      %79 = vector.shape_cast %78 : vector<8xf32> to vector<8x1xf32>
      %80 = arith.maximumf %77, %79 : vector<8x1xf32>
      %81 = arith.subf %77, %80 : vector<8x1xf32>
      %82 = math.exp %81 : vector<8x1xf32>
      %83 = vector.broadcast %80 : vector<8x1xf32> to vector<8x8xf32>
      %84 = arith.subf %76, %83 : vector<8x8xf32>
      %85 = math.exp %84 : vector<8x8xf32>
      %c0_40 = arith.constant 0 : index
      %c1_41 = arith.constant 1 : index
      %86 = vector.load %arg16[%c0_40, %c1_41] : memref<8x4xf32, #tpu.memory_space<vmem>>, vector<8x1xf32>
      %87 = arith.mulf %82, %86 : vector<8x1xf32>
      %cst_42 = arith.constant dense<0.000000e+00> : vector<8xf32>
      %88 = vector.multi_reduction <add>, %85, %cst_42 [1] : vector<8x8xf32> to vector<8xf32>
      %89 = vector.shape_cast %88 : vector<8xf32> to vector<8x1xf32>
      %90 = arith.addf %87, %89 : vector<8x1xf32>
      %c0_43 = arith.constant 0 : index
      %c1_44 = arith.constant 1 : index
      %91 = vector.load %arg16[%c0_43, %c1_44] : memref<8x4xf32, #tpu.memory_space<vmem>>, vector<8x1xf32>
      tpu.vector_store %arg16[%c0_43, %c1_44], %90 {strides = array<i32>} : memref<8x4xf32, #tpu.memory_space<vmem>>, vector<8x1xf32>,
      %92 = arith.truncf %85 : vector<8x8xf32> to vector<8x8xbf16>
      %cst_45 = arith.constant dense<0.000000e+00> : vector<8x8xf32>
      %93 = tpu.matmul %92, %73, %cst_45 {dimension_numbers = #tpu.dot_dimension_numbers<[1], [0], [0], [1], [0, 0, 1, 1], [], []>} : vector<8x8xbf16>, vector<8x8xbf16>, vector<8x8xf32> -> vector<8x8xf32>
      %c0_46 = arith.constant 0 : index
      %c8_47 = arith.constant 8 : index
      %94 = vector.load %arg14[%c0_46, %c8_47] : memref<8x32xf32, #tpu.memory_space<vmem>>, vector<8x8xf32>
      %95 = vector.broadcast %82 : vector<8x1xf32> to vector<8x8xf32>
      %96 = arith.mulf %95, %94 : vector<8x8xf32>
      %97 = arith.addf %96, %93 : vector<8x8xf32>
      %c0_48 = arith.constant 0 : index
      %c8_49 = arith.constant 8 : index
      %98 = vector.load %arg14[%c0_48, %c8_49] : memref<8x32xf32, #tpu.memory_space<vmem>>, vector<8x8xf32>
      tpu.vector_store %arg14[%c0_48, %c8_49], %97 {strides = array<i32>} : memref<8x32xf32, #tpu.memory_space<vmem>>, vector<8x8xf32>,
      %c0_50 = arith.constant 0 : index
      %c1_51 = arith.constant 1 : index
      %99 = vector.load %arg15[%c0_50, %c1_51] : memref<8x4xf32, #tpu.memory_space<vmem>>, vector<8x1xf32>
      tpu.vector_store %arg15[%c0_50, %c1_51], %80 {strides = array<i32>} : memref<8x4xf32, #tpu.memory_space<vmem>>, vector<8x1xf32>,
      %c0_52 = arith.constant 0 : index
      %c16 = arith.constant 16 : index
      %100 = vector.load %arg13[%c0_52, %c16] : memref<8x32xbf16, #tpu.memory_space<vmem>>, vector<8x8xbf16>
      %101 = vector.extract_strided_slice %32 {offsets = [0, 16], sizes = [8, 8], strides = [1, 1]} : vector<8x64xbf16> to vector<8x8xbf16>
      %102 = vector.extract_strided_slice %32 {offsets = [0, 48], sizes = [8, 8], strides = [1, 1]} : vector<8x64xbf16> to vector<8x8xbf16>
      %cst_53 = arith.constant dense<0.000000e+00> : vector<8x8xf32>
      %103 = tpu.matmul %100, %101, %cst_53 {dimension_numbers = #tpu.dot_dimension_numbers<[1], [1], [0], [0], [0, 0, 1, 0], [], []>} : vector<8x8xbf16>, vector<8x8xbf16>, vector<8x8xf32> -> vector<8x8xf32>
      %cst_54 = arith.constant -1.000000e+30 : f32
      %104 = vector.broadcast %cst_54 : f32 to vector<8x8xf32>
      %105 = arith.select %41, %103, %104 : vector<8x8xi1>, vector<8x8xf32>
      %c0_55 = arith.constant 0 : index
      %c2 = arith.constant 2 : index
      %106 = vector.load %arg15[%c0_55, %c2] : memref<8x4xf32, #tpu.memory_space<vmem>>, vector<8x1xf32>
      %cst_56 = arith.constant dense<0xFF800000> : vector<8xf32>
      %107 = vector.multi_reduction <maximumf>, %105, %cst_56 [1] : vector<8x8xf32> to vector<8xf32>
      %108 = vector.shape_cast %107 : vector<8xf32> to vector<8x1xf32>
      %109 = arith.maximumf %106, %108 : vector<8x1xf32>
      %110 = arith.subf %106, %109 : vector<8x1xf32>
      %111 = math.exp %110 : vector<8x1xf32>
      %112 = vector.broadcast %109 : vector<8x1xf32> to vector<8x8xf32>
      %113 = arith.subf %105, %112 : vector<8x8xf32>
      %114 = math.exp %113 : vector<8x8xf32>
      %c0_57 = arith.constant 0 : index
      %c2_58 = arith.constant 2 : index
      %115 = vector.load %arg16[%c0_57, %c2_58] : memref<8x4xf32, #tpu.memory_space<vmem>>, vector<8x1xf32>
      %116 = arith.mulf %111, %115 : vector<8x1xf32>
      %cst_59 = arith.constant dense<0.000000e+00> : vector<8xf32>
      %117 = vector.multi_reduction <add>, %114, %cst_59 [1] : vector<8x8xf32> to vector<8xf32>
      %118 = vector.shape_cast %117 : vector<8xf32> to vector<8x1xf32>
      %119 = arith.addf %116, %118 : vector<8x1xf32>
      %c0_60 = arith.constant 0 : index
      %c2_61 = arith.constant 2 : index
      %120 = vector.load %arg16[%c0_60, %c2_61] : memref<8x4xf32, #tpu.memory_space<vmem>>, vector<8x1xf32>
      tpu.vector_store %arg16[%c0_60, %c2_61], %119 {strides = array<i32>} : memref<8x4xf32, #tpu.memory_space<vmem>>, vector<8x1xf32>,
      %121 = arith.truncf %114 : vector<8x8xf32> to vector<8x8xbf16>
      %cst_62 = arith.constant dense<0.000000e+00> : vector<8x8xf32>
      %122 = tpu.matmul %121, %102, %cst_62 {dimension_numbers = #tpu.dot_dimension_numbers<[1], [0], [0], [1], [0, 0, 1, 1], [], []>} : vector<8x8xbf16>, vector<8x8xbf16>, vector<8x8xf32> -> vector<8x8xf32>
      %c0_63 = arith.constant 0 : index
      %c16_64 = arith.constant 16 : index
      %123 = vector.load %arg14[%c0_63, %c16_64] : memref<8x32xf32, #tpu.memory_space<vmem>>, vector<8x8xf32>
      %124 = vector.broadcast %111 : vector<8x1xf32> to vector<8x8xf32>
      %125 = arith.mulf %124, %123 : vector<8x8xf32>
      %126 = arith.addf %125, %122 : vector<8x8xf32>
      %c0_65 = arith.constant 0 : index
      %c16_66 = arith.constant 16 : index
      %127 = vector.load %arg14[%c0_65, %c16_66] : memref<8x32xf32, #tpu.memory_space<vmem>>, vector<8x8xf32>
      tpu.vector_store %arg14[%c0_65, %c16_66], %126 {strides = array<i32>} : memref<8x32xf32, #tpu.memory_space<vmem>>, vector<8x8xf32>,
      %c0_67 = arith.constant 0 : index
      %c2_68 = arith.constant 2 : index
      %128 = vector.load %arg15[%c0_67, %c2_68] : memref<8x4xf32, #tpu.memory_space<vmem>>, vector<8x1xf32>
      tpu.vector_store %arg15[%c0_67, %c2_68], %109 {strides = array<i32>} : memref<8x4xf32, #tpu.memory_space<vmem>>, vector<8x1xf32>,
      %c0_69 = arith.constant 0 : index
      %c24 = arith.constant 24 : index
      %129 = vector.load %arg13[%c0_69, %c24] : memref<8x32xbf16, #tpu.memory_space<vmem>>, vector<8x8xbf16>
      %130 = vector.extract_strided_slice %32 {offsets = [0, 24], sizes = [8, 8], strides = [1, 1]} : vector<8x64xbf16> to vector<8x8xbf16>
      %131 = vector.extract_strided_slice %32 {offsets = [0, 56], sizes = [8, 8], strides = [1, 1]} : vector<8x64xbf16> to vector<8x8xbf16>
      %cst_70 = arith.constant dense<0.000000e+00> : vector<8x8xf32>
      %132 = tpu.matmul %129, %130, %cst_70 {dimension_numbers = #tpu.dot_dimension_numbers<[1], [1], [0], [0], [0, 0, 1, 0], [], []>} : vector<8x8xbf16>, vector<8x8xbf16>, vector<8x8xf32> -> vector<8x8xf32>
      %cst_71 = arith.constant -1.000000e+30 : f32
      %133 = vector.broadcast %cst_71 : f32 to vector<8x8xf32>
      %134 = arith.select %41, %132, %133 : vector<8x8xi1>, vector<8x8xf32>
      %c0_72 = arith.constant 0 : index
      %c3 = arith.constant 3 : index
      %135 = vector.load %arg15[%c0_72, %c3] : memref<8x4xf32, #tpu.memory_space<vmem>>, vector<8x1xf32>
      %cst_73 = arith.constant dense<0xFF800000> : vector<8xf32>
      %136 = vector.multi_reduction <maximumf>, %134, %cst_73 [1] : vector<8x8xf32> to vector<8xf32>
      %137 = vector.shape_cast %136 : vector<8xf32> to vector<8x1xf32>
      %138 = arith.maximumf %135, %137 : vector<8x1xf32>
      %139 = arith.subf %135, %138 : vector<8x1xf32>
      %140 = math.exp %139 : vector<8x1xf32>
      %141 = vector.broadcast %138 : vector<8x1xf32> to vector<8x8xf32>
      %142 = arith.subf %134, %141 : vector<8x8xf32>
      %143 = math.exp %142 : vector<8x8xf32>
      %c0_74 = arith.constant 0 : index
      %c3_75 = arith.constant 3 : index
      %144 = vector.load %arg16[%c0_74, %c3_75] : memref<8x4xf32, #tpu.memory_space<vmem>>, vector<8x1xf32>
      %145 = arith.mulf %140, %144 : vector<8x1xf32>
      %cst_76 = arith.constant dense<0.000000e+00> : vector<8xf32>
      %146 = vector.multi_reduction <add>, %143, %cst_76 [1] : vector<8x8xf32> to vector<8xf32>
      %147 = vector.shape_cast %146 : vector<8xf32> to vector<8x1xf32>
      %148 = arith.addf %145, %147 : vector<8x1xf32>
      %c0_77 = arith.constant 0 : index
      %c3_78 = arith.constant 3 : index
      %149 = vector.load %arg16[%c0_77, %c3_78] : memref<8x4xf32, #tpu.memory_space<vmem>>, vector<8x1xf32>
      tpu.vector_store %arg16[%c0_77, %c3_78], %148 {strides = array<i32>} : memref<8x4xf32, #tpu.memory_space<vmem>>, vector<8x1xf32>,
      %150 = arith.truncf %143 : vector<8x8xf32> to vector<8x8xbf16>
      %cst_79 = arith.constant dense<0.000000e+00> : vector<8x8xf32>
      %151 = tpu.matmul %150, %131, %cst_79 {dimension_numbers = #tpu.dot_dimension_numbers<[1], [0], [0], [1], [0, 0, 1, 1], [], []>} : vector<8x8xbf16>, vector<8x8xbf16>, vector<8x8xf32> -> vector<8x8xf32>
      %c0_80 = arith.constant 0 : index
      %c24_81 = arith.constant 24 : index
      %152 = vector.load %arg14[%c0_80, %c24_81] : memref<8x32xf32, #tpu.memory_space<vmem>>, vector<8x8xf32>
      %153 = vector.broadcast %140 : vector<8x1xf32> to vector<8x8xf32>
      %154 = arith.mulf %153, %152 : vector<8x8xf32>
      %155 = arith.addf %154, %151 : vector<8x8xf32>
      %c0_82 = arith.constant 0 : index
      %c24_83 = arith.constant 24 : index
      %156 = vector.load %arg14[%c0_82, %c24_83] : memref<8x32xf32, #tpu.memory_space<vmem>>, vector<8x8xf32>
      tpu.vector_store %arg14[%c0_82, %c24_83], %155 {strides = array<i32>} : memref<8x32xf32, #tpu.memory_space<vmem>>, vector<8x8xf32>,
      %c0_84 = arith.constant 0 : index
      %c3_85 = arith.constant 3 : index
      %157 = vector.load %arg15[%c0_84, %c3_85] : memref<8x4xf32, #tpu.memory_space<vmem>>, vector<8x1xf32>
      tpu.vector_store %arg15[%c0_84, %c3_85], %138 {strides = array<i32>} : memref<8x4xf32, #tpu.memory_space<vmem>>, vector<8x1xf32>,
    } else {
    }
    %c0_i32_3 = arith.constant 0 : i32
    %9 = arith.cmpi eq, %arg2, %c0_i32_3 : i32
    %10 = arith.extui %9 : i1 to i32
    %c0_i32_4 = arith.constant 0 : i32
    %11 = arith.cmpi ne, %10, %c0_i32_4 : i32
    scf.if %11 {
      %c0 = arith.constant 0 : index
      %c0_5 = arith.constant 0 : index
      %12 = vector.load %arg16[%c0, %c0_5] : memref<8x4xf32, #tpu.memory_space<vmem>>, vector<8x1xf32>
      %13 = tpu.reciprocal %12 {approx = true} : vector<8x1xf32> -> vector<8x1xf32>
      %c0_6 = arith.constant 0 : index
      %c0_7 = arith.constant 0 : index
      %14 = vector.load %arg14[%c0_6, %c0_7] : memref<8x32xf32, #tpu.memory_space<vmem>>, vector<8x8xf32>
      %15 = vector.broadcast %13 : vector<8x1xf32> to vector<8x8xf32>
      %16 = arith.mulf %14, %15 : vector<8x8xf32>
      %c0_8 = arith.constant 0 : index
      %c0_9 = arith.constant 0 : index
      %17 = vector.load %arg14[%c0_8, %c0_9] : memref<8x32xf32, #tpu.memory_space<vmem>>, vector<8x8xf32>
      tpu.vector_store %arg14[%c0_8, %c0_9], %16 {strides = array<i32>} : memref<8x32xf32, #tpu.memory_space<vmem>>, vector<8x8xf32>,
      %c0_10 = arith.constant 0 : index
      %c1 = arith.constant 1 : index
      %18 = vector.load %arg16[%c0_10, %c1] : memref<8x4xf32, #tpu.memory_space<vmem>>, vector<8x1xf32>
      %19 = tpu.reciprocal %18 {approx = true} : vector<8x1xf32> -> vector<8x1xf32>
      %c0_11 = arith.constant 0 : index
      %c8 = arith.constant 8 : index
      %20 = vector.load %arg14[%c0_11, %c8] : memref<8x32xf32, #tpu.memory_space<vmem>>, vector<8x8xf32>
      %21 = vector.broadcast %19 : vector<8x1xf32> to vector<8x8xf32>
      %22 = arith.mulf %20, %21 : vector<8x8xf32>
      %c0_12 = arith.constant 0 : index
      %c8_13 = arith.constant 8 : index
      %23 = vector.load %arg14[%c0_12, %c8_13] : memref<8x32xf32, #tpu.memory_space<vmem>>, vector<8x8xf32>
      tpu.vector_store %arg14[%c0_12, %c8_13], %22 {strides = array<i32>} : memref<8x32xf32, #tpu.memory_space<vmem>>, vector<8x8xf32>,
      %c0_14 = arith.constant 0 : index
      %c2 = arith.constant 2 : index
      %24 = vector.load %arg16[%c0_14, %c2] : memref<8x4xf32, #tpu.memory_space<vmem>>, vector<8x1xf32>
      %25 = tpu.reciprocal %24 {approx = true} : vector<8x1xf32> -> vector<8x1xf32>
      %c0_15 = arith.constant 0 : index
      %c16 = arith.constant 16 : index
      %26 = vector.load %arg14[%c0_15, %c16] : memref<8x32xf32, #tpu.memory_space<vmem>>, vector<8x8xf32>
      %27 = vector.broadcast %25 : vector<8x1xf32> to vector<8x8xf32>
      %28 = arith.mulf %26, %27 : vector<8x8xf32>
      %c0_16 = arith.constant 0 : index
      %c16_17 = arith.constant 16 : index
      %29 = vector.load %arg14[%c0_16, %c16_17] : memref<8x32xf32, #tpu.memory_space<vmem>>, vector<8x8xf32>
      tpu.vector_store %arg14[%c0_16, %c16_17], %28 {strides = array<i32>} : memref<8x32xf32, #tpu.memory_space<vmem>>, vector<8x8xf32>,
      %c0_18 = arith.constant 0 : index
      %c3 = arith.constant 3 : index
      %30 = vector.load %arg16[%c0_18, %c3] : memref<8x4xf32, #tpu.memory_space<vmem>>, vector<8x1xf32>
      %31 = tpu.reciprocal %30 {approx = true} : vector<8x1xf32> -> vector<8x1xf32>
      %c0_19 = arith.constant 0 : index
      %c24 = arith.constant 24 : index
      %32 = vector.load %arg14[%c0_19, %c24] : memref<8x32xf32, #tpu.memory_space<vmem>>, vector<8x8xf32>
      %33 = vector.broadcast %31 : vector<8x1xf32> to vector<8x8xf32>
      %34 = arith.mulf %32, %33 : vector<8x8xf32>
      %c0_20 = arith.constant 0 : index
      %c24_21 = arith.constant 24 : index
      %35 = vector.load %arg14[%c0_20, %c24_21] : memref<8x32xf32, #tpu.memory_space<vmem>>, vector<8x8xf32>
      tpu.vector_store %arg14[%c0_20, %c24_21], %34 {strides = array<i32>} : memref<8x32xf32, #tpu.memory_space<vmem>>, vector<8x8xf32>,
      %c0_22 = arith.constant 0 : index
      %c0_23 = arith.constant 0 : index
      %36 = vector.load %arg14[%c0_22, %c0_23] : memref<8x32xf32, #tpu.memory_space<vmem>>, vector<8x32xf32>
      %37 = arith.truncf %36 : vector<8x32xf32> to vector<8x32xbf16>
      %c0_24 = arith.constant 0 : index
      %c0_25 = arith.constant 0 : index
      %38 = vector.load %arg7[%c0_24, %c0_25] : memref<32x32xbf16, #tpu.memory_space<vmem>>, vector<32x32xbf16>
      %cst = arith.constant dense<0.000000e+00> : vector<8x32xf32>
      %39 = tpu.matmul %37, %38, %cst {dimension_numbers = #tpu.dot_dimension_numbers<[1], [0], [0], [1], [0, 0, 1, 1], [], []>} : vector<8x32xbf16>, vector<32x32xbf16>, vector<8x32xf32> -> vector<8x32xf32>
      %c0_26 = arith.constant 0 : index
      %c0_27 = arith.constant 0 : index
      %c0_28 = arith.constant 0 : index
      %40 = vector.load %arg3[%c0_26, %c0_27, %c0_28] : memref<1x8x32xf32, #tpu.memory_space<vmem>>, vector<1x8x32xf32>
      %41 = vector.shape_cast %40 : vector<1x8x32xf32> to vector<8x32xf32>
      %42 = arith.addf %41, %39 : vector<8x32xf32>
      %c0_29 = arith.constant 0 : index
      %c0_30 = arith.constant 0 : index
      %43 = vector.load %arg11[%c0_29, %c0_30] : memref<1x32xf32, #tpu.memory_space<vmem>>, vector<1x32xf32>
      %44 = vector.shape_cast %43 : vector<1x32xf32> to vector<32xf32>
      %45 = arith.mulf %42, %42 : vector<8x32xf32>
      %cst_31 = arith.constant dense<0.000000e+00> : vector<8xf32>
      %46 = vector.multi_reduction <add>, %45, %cst_31 [1] : vector<8x32xf32> to vector<8xf32>
      %47 = vector.shape_cast %46 : vector<8xf32> to vector<8x1xf32>
      %cst_32 = arith.constant 3.200000e+01 : f32
      %48 = vector.broadcast %cst_32 : f32 to vector<8x1xf32>
      %49 = arith.divf %47, %48 : vector<8x1xf32>
      %cst_33 = arith.constant 9.99999997E-7 : f32
      %50 = vector.broadcast %cst_33 : f32 to vector<8x1xf32>
      %51 = arith.addf %49, %50 : vector<8x1xf32>
      %52 = math.rsqrt %51 : vector<8x1xf32>
      %53 = vector.broadcast %52 : vector<8x1xf32> to vector<8x32xf32>
      %54 = arith.mulf %42, %53 : vector<8x32xf32>
      %55 = vector.shape_cast %44 : vector<32xf32> to vector<1x32xf32>
      %56 = vector.broadcast %55 : vector<1x32xf32> to vector<8x32xf32>
      %57 = arith.mulf %54, %56 : vector<8x32xf32>
      %58 = arith.truncf %57 : vector<8x32xf32> to vector<8x32xbf16>
      %c0_34 = arith.constant 0 : index
      %c0_35 = arith.constant 0 : index
      %59 = vector.load %arg8[%c0_34, %c0_35] : memref<32x64xbf16, #tpu.memory_space<vmem>>, vector<32x64xbf16>
      %cst_36 = arith.constant dense<0.000000e+00> : vector<8x64xf32>
      %60 = tpu.matmul %58, %59, %cst_36 {dimension_numbers = #tpu.dot_dimension_numbers<[1], [0], [0], [1], [0, 0, 1, 1], [], []>} : vector<8x32xbf16>, vector<32x64xbf16>, vector<8x64xf32> -> vector<8x64xf32>
      %61 = vector.extract_strided_slice %60 {offsets = [0, 0], sizes = [8, 32], strides = [1, 1]} : vector<8x64xf32> to vector<8x32xf32>
      %62 = vector.extract_strided_slice %60 {offsets = [0, 32], sizes = [8, 32], strides = [1, 1]} : vector<8x64xf32> to vector<8x32xf32>
      %63 = arith.negf %61 : vector<8x32xf32>
      %64 = math.exp %63 : vector<8x32xf32>
      %cst_37 = arith.constant 1.000000e+00 : f32
      %65 = vector.broadcast %cst_37 : f32 to vector<8x32xf32>
      %66 = arith.addf %65, %64 : vector<8x32xf32>
      %67 = arith.divf %65, %66 : vector<8x32xf32>
      %68 = arith.mulf %61, %67 : vector<8x32xf32>
      %69 = arith.mulf %68, %62 : vector<8x32xf32>
      %70 = arith.truncf %69 : vector<8x32xf32> to vector<8x32xbf16>
      %c0_38 = arith.constant 0 : index
      %c0_39 = arith.constant 0 : index
      %71 = vector.load %arg9[%c0_38, %c0_39] : memref<32x32xbf16, #tpu.memory_space<vmem>>, vector<32x32xbf16>
      %cst_40 = arith.constant dense<0.000000e+00> : vector<8x32xf32>
      %72 = tpu.matmul %70, %71, %cst_40 {dimension_numbers = #tpu.dot_dimension_numbers<[1], [0], [0], [1], [0, 0, 1, 1], [], []>} : vector<8x32xbf16>, vector<32x32xbf16>, vector<8x32xf32> -> vector<8x32xf32>
      %73 = arith.addf %42, %72 : vector<8x32xf32>
      %c0_41 = arith.constant 0 : index
      %c0_42 = arith.constant 0 : index
      %c0_43 = arith.constant 0 : index
      %74 = vector.load %arg12[%c0_41, %c0_42, %c0_43] : memref<1x8x32xf32, #tpu.memory_space<vmem>>, vector<1x8x32xf32>
      %75 = vector.shape_cast %74 : vector<1x8x32xf32> to vector<8x32xf32>
      %76 = vector.shape_cast %73 : vector<8x32xf32> to vector<1x8x32xf32>
      tpu.vector_store %arg12[%c0_41, %c0_42, %c0_43], %76 {strides = array<i32>} : memref<1x8x32xf32, #tpu.memory_space<vmem>>, vector<1x8x32xf32>,
    } else {
    }
    return
  }
  func.func @transform_0(%arg0: i32, %arg1: i32, %arg2: i32) -> (i32, i32, i32) {
    %c0_i32 = arith.constant 0 : i32
    %c0_i32_0 = arith.constant 0 : i32
    return %arg0, %arg1, %c0_i32 : i32, i32, i32
  }
  func.func @transform_1(%arg0: i32, %arg1: i32, %arg2: i32) -> (i32, i32, i32) {
    %c0_i32 = arith.constant 0 : i32
    %c0_i32_0 = arith.constant 0 : i32
    return %arg0, %arg2, %c0_i32 : i32, i32, i32
  }
  func.func @transform_2(%arg0: i32, %arg1: i32, %arg2: i32) -> (i32, i32) {
    %c0_i32 = arith.constant 0 : i32
    %c0_i32_0 = arith.constant 0 : i32
    %c0_i32_1 = arith.constant 0 : i32
    return %c0_i32, %c0_i32_0 : i32, i32
  }
  func.func @transform_3(%arg0: i32, %arg1: i32, %arg2: i32) -> (i32, i32) {
    %c0_i32 = arith.constant 0 : i32
    %c0_i32_0 = arith.constant 0 : i32
    %c0_i32_1 = arith.constant 0 : i32
    return %c0_i32, %c0_i32_0 : i32, i32
  }
  func.func @transform_4(%arg0: i32, %arg1: i32, %arg2: i32) -> (i32, i32) {
    %c0_i32 = arith.constant 0 : i32
    %c0_i32_0 = arith.constant 0 : i32
    %c0_i32_1 = arith.constant 0 : i32
    return %c0_i32, %c0_i32_0 : i32, i32
  }
  func.func @transform_5(%arg0: i32, %arg1: i32, %arg2: i32) -> (i32, i32) {
    %c0_i32 = arith.constant 0 : i32
    %c0_i32_0 = arith.constant 0 : i32
    %c0_i32_1 = arith.constant 0 : i32
    return %c0_i32, %c0_i32_0 : i32, i32
  }
  func.func @transform_6(%arg0: i32, %arg1: i32, %arg2: i32) -> (i32, i32) {
    %c0_i32 = arith.constant 0 : i32
    %c0_i32_0 = arith.constant 0 : i32
    %c0_i32_1 = arith.constant 0 : i32
    return %c0_i32, %c0_i32_0 : i32, i32
  }
  func.func @transform_7(%arg0: i32, %arg1: i32, %arg2: i32) -> (i32, i32) {
    %c0_i32 = arith.constant 0 : i32
    %c0_i32_0 = arith.constant 0 : i32
    %c0_i32_1 = arith.constant 0 : i32
    return %c0_i32, %c0_i32_0 : i32, i32
  }
  func.func @transform_8(%arg0: i32, %arg1: i32, %arg2: i32) -> (i32, i32) {
    %c0_i32 = arith.constant 0 : i32
    %c0_i32_0 = arith.constant 0 : i32
    %c0_i32_1 = arith.constant 0 : i32
    return %c0_i32, %c0_i32_0 : i32, i32
  }
  func.func @transform_9(%arg0: i32, %arg1: i32, %arg2: i32) -> (i32, i32, i32) {
    %c0_i32 = arith.constant 0 : i32
    %c0_i32_0 = arith.constant 0 : i32
    return %arg0, %arg1, %c0_i32 : i32, i32, i32
  }
}

</mosaic_0001>

<llo_original>
// kernel: tpu_custom_call.1
$region0: #{tpu_custom_call.1}
  #allocation0 [shape = 'u32[]', space=smem, size = 0x4, offset = 0x4, fixed_abs, tag = 'smem constant byte address 0x4 - core index']
  #allocation1 [shape = 'u32[144,128]{1,0:T(1,128)}', space=vmem, size = 0x12000, scoped, tag = 'internal scratch']
  #allocation2 [shape = 'bf16[8,32]{1,0:T(8,128)(2,1)}', space=vmem, size = 0x800, scoped, tag = 'scratch operand']
  #allocation3 [shape = 'f32[8,32]{1,0:T(8,128)}', space=vmem, size = 0x1000, scoped, tag = 'scratch operand']
  #allocation4 [shape = 'f32[8,4]{1,0:T(8,128)}', space=vmem, size = 0x1000, scoped, tag = 'scratch operand']
  #allocation5 [shape = 'f32[8,4]{1,0:T(8,128)}', space=vmem, size = 0x1000, scoped, tag = 'scratch operand']
  %s0 = inlined_call_operand.hbm [shape: f32[2,8,32], index: 0, kind: input, shape index: {}]
  %s1 = inlined_call_operand.hbm [shape: f32[2,8,32], index: 1, kind: input, shape index: {}]
  %s2 = inlined_call_operand.hbm [shape: bf16[32,32], index: 2, kind: input, shape index: {}]
  %s3 = inlined_call_operand.hbm [shape: bf16[32,64], index: 3, kind: input, shape index: {}]
  %s4 = inlined_call_operand.hbm [shape: bf16[32,32], index: 4, kind: input, shape index: {}]
  %s5 = inlined_call_operand.vmem [shape: bf16[32,64], index: 5, kind: input, shape index: {}]
  %s6 = inlined_call_operand.hbm [shape: bf16[32,32], index: 6, kind: input, shape index: {}]
  %s7 = inlined_call_operand.vmem [shape: f32[1,32], index: 7, kind: input, shape index: {}]
  %s8 = inlined_call_operand.vmem [shape: f32[1,32], index: 8, kind: input, shape index: {}]
  %s9 = inlined_call_operand.hbm [shape: f32[2,8,32], index: 9, kind: output, shape index: {}]
  %s10 = sld [smem:[#allocation0]]
  $region105: #{tpu_custom_call.1} parent=0
    _
  %s12 = ssub.s32 1, %s10
  %s13 = scalar_select 0, %s12, %s10
  $region1: #{tpu_custom_call.1} parent=0
    #allocation6 [shape = 'u8[8192]{0}', space=vmem, size = 0x2000, scoped, tag = 'input window, operand 0']
    #allocation7 [shape = 's32[2]{0}', space=sflag, size = 0x8, scoped, tag = 'scoped memory for tpu_custom_call.1']
    #allocation8 [shape = 's32[2]{0}', space=sflag, size = 0x8, scoped, tag = 'scoped memory for tpu_custom_call.1']
    #allocation9 [shape = 'u8[8192]{0}', space=vmem, size = 0x2000, scoped, tag = 'input window, operand 1']
    #allocation10 [shape = 's32[2]{0}', space=sflag, size = 0x8, scoped, tag = 'scoped memory for tpu_custom_call.1']
    #allocation11 [shape = 'u8[8192]{0}', space=vmem, size = 0x2000, scoped, tag = 'input window, operand 2, single buffered']
    #allocation12 [shape = 'u8[8192]{0}', space=vmem, size = 0x2000, scoped, tag = 'input window, operand 3, single buffered']
    #allocation13 [shape = 's32[1]{0}', space=sflag, size = 0x4, scoped, tag = 'scoped memory for tpu_custom_call.1']
    #allocation14 [shape = 'u8[8192]{0}', space=vmem, size = 0x2000, scoped, tag = 'input window, operand 4, single buffered']
    #allocation15 [shape = 'u8[8192]{0}', space=vmem, size = 0x2000, scoped, tag = 'input window, operand 6, single buffered']
    #allocation16 [shape = 's32[1]{0}', space=sflag, size = 0x4, scoped, tag = 'scoped memory for tpu_custom_call.1']
    #allocation17 [shape = 'u8[8192]{0}', space=vmem, size = 0x2000, scoped, tag = 'output window, operand 0']
    %14 = vsyncpa [#allocation7], 0
    %s15 = scalar_lea.sflag [#allocation7], 1
    %16 = vsyncpa %s15, 0
    %17 = vsyncpa [#allocation10], 0
    %s18 = scalar_lea.sflag [#allocation10], 1
    %19 = vsyncpa %s18, 0
    %20 = vsyncpa [#allocation13], 0
    %21 = vsyncpa [#allocation16], 0
    %22 = vsyncpa [#allocation8], 0
    %s23 = scalar_lea.sflag [#allocation8], 1
    %24 = vsyncpa %s23, 0
    loop: start=0, step=1, limit=4
    $region2: #{tpu_custom_call.1} parent=1 // loop_pre_header
      _
    $region3: #{tpu_custom_call.1} parent=1 // loop_header
      %s26 = sphi 0, %s30
      %p27 = scmp.ge.s32.totalorder %s26, 4
      %s33 = sphi 0, %s52
      %s34 = sphi 0, %s48
      %s35 = sphi 0, %s44
      %s36 = sphi 0, %s33
      %s37 = sphi 0, %s34
      %s38 = sphi 0, %s35
      %s39 = sphi 0, %s36
      %s40 = sphi 0, %s37
      %s41 = sphi 0, %s38
      %s57 = sphi 0, %s59
      %s60 = sphi 0, %s57
      %s61 = sphi 0, %s60
      %s77 = sphi 0, %s61
      %s85 = sphi 0, %s87
      %s88 = sphi 0, %s85
      %s89 = sphi 0, %s88
      %s105 = sphi 0, %s89
      %s109 = sphi 0, %s109
      %s111 = sphi 0, %s109
      %s112 = sphi 0, %s111
      %s126 = sphi 0, %s112
      %s130 = sphi 0, %s130
      %s132 = sphi 0, %s130
      %s133 = sphi 0, %s132
      %s147 = sphi 0, %s133
      %s151 = sphi 0, %s151
      %s153 = sphi 0, %s151
      %s154 = sphi 0, %s153
      %s168 = sphi 0, %s154
      %s172 = sphi 0, %s172
      %s174 = sphi 0, %s172
      %s175 = sphi 0, %s174
      %s189 = sphi 0, %s175
      %s193 = sphi 0, %s193
      %s195 = sphi 0, %s193
      %s196 = sphi 0, %s195
      %s210 = sphi 0, %s196
      %s214 = sphi 0, %s214
      %s216 = sphi 0, %s214
      %s217 = sphi 0, %s216
      %s231 = sphi 0, %s217
      %s235 = sphi 0, %s235
      %s237 = sphi 0, %s235
      %s238 = sphi 0, %s237
      %s252 = sphi 0, %s238
      %s260 = sphi 0, %s262
      %s263 = sphi 0, %s260
      %s264 = sphi 0, %s263
      %s280 = sphi 0, %s264
    $region4: #{tpu_custom_call.1} parent=1 // loop_header_branch
      %29 = sbr.rel (%p27) target = $region8
    $region5: #{tpu_custom_call.1} parent=1 // loop_body
      %s31 = ssub.s32 %s26, 1
      %s32 = ssub.s32 %s26, 2
      %s42 = sadd.s32 1, %s35
      %p43 = scmp.ge.s32.totalorder %s42, 1
      %s44 = scalar_select %p43, 0, %s42
      %s45 = sadd.s32 1, %s34
      %s46 = scalar_select %p43, %s45, %s34
      %p47 = scmp.ge.s32.totalorder %s46, 1
      %s48 = scalar_select %p47, 0, %s46
      %s49 = sadd.s32 1, %s33
      %s50 = scalar_select %p47, %s49, %s33
      %p51 = scmp.ge.s32.totalorder %s50, 2
      %s52 = scalar_select %p51, 0, %s50
      %s53 = ssub.s32 %s33, %s52
      %s54 = ssub.s32 %s34, %s48
      %s55 = sor.u32 %s53, %s54
      %p56 = scmp.eq.s32.totalorder %s55, 0
      %s58 = sadd.s32 %s57, 1
      %s59 = scalar_select %p56, %s57, %s58
      %p62 = pneg %p56
      %p63 = scmp.eq.s32.totalorder %s26, 1
      %p64 = por %p62, %p63
      %p65 = scmp.ne.s32.totalorder %s57, %s60
      %p66 = scmp.eq.s32.totalorder %s26, 0
      %p67 = por %p65, %p66
      %p68 = scmp.ne.s32.totalorder %s57, %s60
      %p69 = scmp.eq.s32.totalorder %s31, 1
      %p70 = por %p68, %p69
      %p71 = scmp.ne.s32.totalorder %s60, %s61
      %p72 = scmp.eq.s32.totalorder %s31, 0
      %p73 = por %p71, %p72
      %p74 = scmp.ne.s32.totalorder %s60, %s61
      %p75 = scmp.eq.s32.totalorder %s32, 1
      %p76 = por %p74, %p75
      %p78 = scmp.ne.s32.totalorder %s61, %s77
      %p79 = scmp.eq.s32.totalorder %s32, 0
      %p80 = por %p78, %p79
      %s81 = ssub.s32 %s33, %s52
      %s82 = ssub.s32 %s35, %s44
      %s83 = sor.u32 %s81, %s82
      %p84 = scmp.eq.s32.totalorder %s83, 0
      %s86 = sadd.s32 %s85, 1
      %s87 = scalar_select %p84, %s85, %s86
      %p90 = pneg %p84
      %p91 = scmp.eq.s32.totalorder %s26, 1
      %p92 = por %p90, %p91
      %p93 = scmp.ne.s32.totalorder %s85, %s88
      %p94 = scmp.eq.s32.totalorder %s26, 0
      %p95 = por %p93, %p94
      %p96 = scmp.ne.s32.totalorder %s85, %s88
      %p97 = scmp.eq.s32.totalorder %s31, 1
      %p98 = por %p96, %p97
      %p99 = scmp.ne.s32.totalorder %s88, %s89
      %p100 = scmp.eq.s32.totalorder %s31, 0
      %p101 = por %p99, %p100
      %p102 = scmp.ne.s32.totalorder %s88, %s89
      %p103 = scmp.eq.s32.totalorder %s32, 1
      %p104 = por %p102, %p103
      %p106 = scmp.ne.s32.totalorder %s89, %s105
      %p107 = scmp.eq.s32.totalorder %s32, 0
      %p108 = por %p106, %p107
      %s110 = sadd.s32 %s109, 1
      %p113 = scmp.eq.s32.totalorder %s26, 1
      %p114 = scmp.ne.s32.totalorder %s109, %s111
      %p115 = scmp.eq.s32.totalorder %s26, 0
      %p116 = por %p114, %p115
      %p117 = scmp.ne.s32.totalorder %s109, %s111
      %p118 = scmp.eq.s32.totalorder %s31, 1
      %p119 = por %p117, %p118
      %p120 = scmp.ne.s32.totalorder %s111, %s112
      %p121 = scmp.eq.s32.totalorder %s31, 0
      %p122 = por %p120, %p121
      %p123 = scmp.ne.s32.totalorder %s111, %s112
      %p124 = scmp.eq.s32.totalorder %s32, 1
      %p125 = por %p123, %p124
      %p127 = scmp.ne.s32.totalorder %s112, %s126
      %p128 = scmp.eq.s32.totalorder %s32, 0
      %p129 = por %p127, %p128
      %s131 = sadd.s32 %s130, 1
      %p134 = scmp.eq.s32.totalorder %s26, 1
      %p135 = scmp.ne.s32.totalorder %s130, %s132
      %p136 = scmp.eq.s32.totalorder %s26, 0
      %p137 = por %p135, %p136
      %p138 = scmp.ne.s32.totalorder %s130, %s132
      %p139 = scmp.eq.s32.totalorder %s31, 1
      %p140 = por %p138, %p139
      %p141 = scmp.ne.s32.totalorder %s132, %s133
      %p142 = scmp.eq.s32.totalorder %s31, 0
      %p143 = por %p141, %p142
      %p144 = scmp.ne.s32.totalorder %s132, %s133
      %p145 = scmp.eq.s32.totalorder %s32, 1
      %p146 = por %p144, %p145
      %p148 = scmp.ne.s32.totalorder %s133, %s147
      %p149 = scmp.eq.s32.totalorder %s32, 0
      %p150 = por %p148, %p149
      %s152 = sadd.s32 %s151, 1
      %p155 = scmp.eq.s32.totalorder %s26, 1
      %p156 = scmp.ne.s32.totalorder %s151, %s153
      %p157 = scmp.eq.s32.totalorder %s26, 0
      %p158 = por %p156, %p157
      %p159 = scmp.ne.s32.totalorder %s151, %s153
      %p160 = scmp.eq.s32.totalorder %s31, 1
      %p161 = por %p159, %p160
      %p162 = scmp.ne.s32.totalorder %s153, %s154
      %p163 = scmp.eq.s32.totalorder %s31, 0
      %p164 = por %p162, %p163
      %p165 = scmp.ne.s32.totalorder %s153, %s154
      %p166 = scmp.eq.s32.totalorder %s32, 1
      %p167 = por %p165, %p166
      %p169 = scmp.ne.s32.totalorder %s154, %s168
      %p170 = scmp.eq.s32.totalorder %s32, 0
      %p171 = por %p169, %p170
      %s173 = sadd.s32 %s172, 1
      %p176 = scmp.eq.s32.totalorder %s26, 1
      %p177 = scmp.ne.s32.totalorder %s172, %s174
      %p178 = scmp.eq.s32.totalorder %s26, 0
      %p179 = por %p177, %p178
      %p180 = scmp.ne.s32.totalorder %s172, %s174
      %p181 = scmp.eq.s32.totalorder %s31, 1
      %p182 = por %p180, %p181
      %p183 = scmp.ne.s32.totalorder %s174, %s175
      %p184 = scmp.eq.s32.totalorder %s31, 0
      %p185 = por %p183, %p184
      %p186 = scmp.ne.s32.totalorder %s174, %s175
      %p187 = scmp.eq.s32.totalorder %s32, 1
      %p188 = por %p186, %p187
      %p190 = scmp.ne.s32.totalorder %s175, %s189
      %p191 = scmp.eq.s32.totalorder %s32, 0
      %p192 = por %p190, %p191
      %s194 = sadd.s32 %s193, 1
      %p197 = scmp.eq.s32.totalorder %s26, 1
      %p198 = scmp.ne.s32.totalorder %s193, %s195
      %p199 = scmp.eq.s32.totalorder %s26, 0
      %p200 = por %p198, %p199
      %p201 = scmp.ne.s32.totalorder %s193, %s195
      %p202 = scmp.eq.s32.totalorder %s31, 1
      %p203 = por %p201, %p202
      %p204 = scmp.ne.s32.totalorder %s195, %s196
      %p205 = scmp.eq.s32.totalorder %s31, 0
      %p206 = por %p204, %p205
      %p207 = scmp.ne.s32.totalorder %s195, %s196
      %p208 = scmp.eq.s32.totalorder %s32, 1
      %p209 = por %p207, %p208
      %p211 = scmp.ne.s32.totalorder %s196, %s210
      %p212 = scmp.eq.s32.totalorder %s32, 0
      %p213 = por %p211, %p212
      %s215 = sadd.s32 %s214, 1
      %p218 = scmp.eq.s32.totalorder %s26, 1
      %p219 = scmp.ne.s32.totalorder %s214, %s216
      %p220 = scmp.eq.s32.totalorder %s26, 0
      %p221 = por %p219, %p220
      %p222 = scmp.ne.s32.totalorder %s214, %s216
      %p223 = scmp.eq.s32.totalorder %s31, 1
      %p224 = por %p222, %p223
      %p225 = scmp.ne.s32.totalorder %s216, %s217
      %p226 = scmp.eq.s32.totalorder %s31, 0
      %p227 = por %p225, %p226
      %p228 = scmp.ne.s32.totalorder %s216, %s217
      %p229 = scmp.eq.s32.totalorder %s32, 1
      %p230 = por %p228, %p229
      %p232 = scmp.ne.s32.totalorder %s217, %s231
      %p233 = scmp.eq.s32.totalorder %s32, 0
      %p234 = por %p232, %p233
      %s236 = sadd.s32 %s235, 1
      %p239 = scmp.eq.s32.totalorder %s26, 1
      %p240 = scmp.ne.s32.totalorder %s235, %s237
      %p241 = scmp.eq.s32.totalorder %s26, 0
      %p242 = por %p240, %p241
      %p243 = scmp.ne.s32.totalorder %s235, %s237
      %p244 = scmp.eq.s32.totalorder %s31, 1
      %p245 = por %p243, %p244
      %p246 = scmp.ne.s32.totalorder %s237, %s238
      %p247 = scmp.eq.s32.totalorder %s31, 0
      %p248 = por %p246, %p247
      %p249 = scmp.ne.s32.totalorder %s237, %s238
      %p250 = scmp.eq.s32.totalorder %s32, 1
      %p251 = por %p249, %p250
      %p253 = scmp.ne.s32.totalorder %s238, %s252
      %p254 = scmp.eq.s32.totalorder %s32, 0
      %p255 = por %p253, %p254
      %s256 = ssub.s32 %s33, %s52
      %s257 = ssub.s32 %s34, %s48
      %s258 = sor.u32 %s256, %s257
      %p259 = scmp.eq.s32.totalorder %s258, 0
      %s261 = sadd.s32 %s260, 1
      %s262 = scalar_select %p259, %s260, %s261
      %p265 = pneg %p259
      %p266 = scmp.eq.s32.totalorder %s26, 1
      %p267 = por %p265, %p266
      %p268 = scmp.ne.s32.totalorder %s260, %s263
      %p269 = scmp.eq.s32.totalorder %s26, 0
      %p270 = por %p268, %p269
      %p271 = scmp.ne.s32.totalorder %s260, %s263
      %p272 = scmp.eq.s32.totalorder %s31, 1
      %p273 = por %p271, %p272
      %p274 = scmp.ne.s32.totalorder %s263, %s264
      %p275 = scmp.eq.s32.totalorder %s31, 0
      %p276 = por %p274, %p275
      %p277 = scmp.ne.s32.totalorder %s263, %s264
      %p278 = scmp.eq.s32.totalorder %s32, 1
      %p279 = por %p277, %p278
      %p281 = scmp.ne.s32.totalorder %s264, %s280
      %p282 = scmp.eq.s32.totalorder %s32, 0
      %p283 = por %p281, %p282
      %p284 = scmp.le.s32.totalorder 1, %s26
      %p285 = scmp.lt.s32.totalorder %s26, 3
      %p286 = pnand %p284, %p285
      %p287 = pneg %p286
      // Predicated region
      $region9: #{tpu_custom_call.1} parent=5 // pred_check
        _
      $region10: #{tpu_custom_call.1} parent=5 // pred_check_branch
        %289 = sbr.rel (%p286) target = $region12
      $region11: #{tpu_custom_call.1} parent=5 // pred_region
        %s290 = ssub.s32 %s26, 1
        // Predicated region
        $region13: #{tpu_custom_call.1} parent=11 // pred_check
          %p291 = pneg %p122
        $region14: #{tpu_custom_call.1} parent=11 // pred_check_branch
          %293 = sbr.rel (%p291) target = $region16
        $region15: #{tpu_custom_call.1} parent=11 // pred_region
          %s295 = ssub.s32 256, 256
          %296 = vsyncadd [#allocation10], %s295
          %s297 = sshll.u32 [#allocation11], 4
          %s298 = int_to_ptr.vmem [resolvable:$true] %s297
          %303 = dma.hbm_to_vmem [thread:$0]  %s2, 256, %s298, [#allocation10], 64, 64, 4
        $region16: #{tpu_custom_call.1} parent=11 // pred_fallthru
          _
        // Predicated region
        $region17: #{tpu_custom_call.1} parent=11 // pred_check
          %p304 = pneg %p143
        $region18: #{tpu_custom_call.1} parent=11 // pred_check_branch
          %306 = sbr.rel (%p304) target = $region20
        $region19: #{tpu_custom_call.1} parent=11 // pred_region
          %s308 = ssub.s32 256, 256
          %309 = vsyncadd [#allocation13], %s308
          %s310 = sshll.u32 [#allocation12], 4
          %s311 = int_to_ptr.vmem [resolvable:$true] %s310
          %316 = dma.hbm_to_vmem [thread:$0]  %s3, 256, %s311, [#allocation13], 64, 64, 4
        $region20: #{tpu_custom_call.1} parent=11 // pred_fallthru
          _
        // Predicated region
        $region21: #{tpu_custom_call.1} parent=11 // pred_check
          %p317 = pneg %p164
        $region22: #{tpu_custom_call.1} parent=11 // pred_check_branch
          %319 = sbr.rel (%p317) target = $region24
        $region23: #{tpu_custom_call.1} parent=11 // pred_region
          %s321 = ssub.s32 256, 256
          %322 = vsyncadd [#allocation13], %s321
          %s323 = sshll.u32 [#allocation14], 4
          %s324 = int_to_ptr.vmem [resolvable:$true] %s323
          %329 = dma.hbm_to_vmem [thread:$0]  %s4, 256, %s324, [#allocation13], 64, 64, 4
        $region24: #{tpu_custom_call.1} parent=11 // pred_fallthru
          _
        // Predicated region
        $region25: #{tpu_custom_call.1} parent=11 // pred_check
          %p330 = pneg %p185
        $region26: #{tpu_custom_call.1} parent=11 // pred_check_branch
          %332 = sbr.rel (%p330) target = $region28
        $region27: #{tpu_custom_call.1} parent=11 // pred_region
          _
        $region28: #{tpu_custom_call.1} parent=11 // pred_fallthru
          _
        // Predicated region
        $region29: #{tpu_custom_call.1} parent=11 // pred_check
          %p333 = pneg %p206
        $region30: #{tpu_custom_call.1} parent=11 // pred_check_branch
          %335 = sbr.rel (%p333) target = $region32
        $region31: #{tpu_custom_call.1} parent=11 // pred_region
          %s337 = ssub.s32 256, 256
          %338 = vsyncadd [#allocation16], %s337
          %s339 = sshll.u32 [#allocation15], 4
          %s340 = int_to_ptr.vmem [resolvable:$true] %s339
          %345 = dma.hbm_to_vmem [thread:$0]  %s6, 256, %s340, [#allocation16], 64, 64, 4
        $region32: #{tpu_custom_call.1} parent=11 // pred_fallthru
          _
        // Predicated region
        $region33: #{tpu_custom_call.1} parent=11 // pred_check
          %p346 = pneg %p227
        $region34: #{tpu_custom_call.1} parent=11 // pred_check_branch
          %348 = sbr.rel (%p346) target = $region36
        $region35: #{tpu_custom_call.1} parent=11 // pred_region
          _
        $region36: #{tpu_custom_call.1} parent=11 // pred_fallthru
          _
        // Predicated region
        $region37: #{tpu_custom_call.1} parent=11 // pred_check
          %p349 = pneg %p248
        $region38: #{tpu_custom_call.1} parent=11 // pred_check_branch
          %351 = sbr.rel (%p349) target = $region40
        $region39: #{tpu_custom_call.1} parent=11 // pred_region
          _
        $region40: #{tpu_custom_call.1} parent=11 // pred_fallthru
          _
      $region12: #{tpu_custom_call.1} parent=5 // pred_fallthru
        _
      %p352 = scmp.lt.s32.totalorder %s26, 2
      // Predicated region
      $region41: #{tpu_custom_call.1} parent=5 // pred_check
        %p353 = pneg %p352
      $region42: #{tpu_custom_call.1} parent=5 // pred_check_branch
        %355 = sbr.rel (%p353) target = $region44
      $region43: #{tpu_custom_call.1} parent=5 // pred_region
        // Predicated region
        $region45: #{tpu_custom_call.1} parent=43 // pred_check
          %p356 = pneg %p67
        $region46: #{tpu_custom_call.1} parent=43 // pred_check_branch
          %358 = sbr.rel (%p356) target = $region48
        $region47: #{tpu_custom_call.1} parent=43 // pred_region
          %s359 = sand.u32 %s57, 1
          %s360 = scalar_lea.sflag [#allocation7], %s359
          %s361 = sand.u32 %s57, 1
          %s362 = smul.addr %s361, 8
          %s363 = scalar_lea.vmem [#allocation6], %s362
          %s365 = ssub.s32 128, 128
          %366 = vsyncadd %s360, %s365
          %s367 = sadd.s32 %s34, %s33
          %s368 = smul.addr %s367, 128
          %s369 = scalar_lea.hbm %s0, %s368
          %s371 = sshll.u32 %s363, 4
          %s372 = int_to_ptr.vmem [resolvable:$true] %s371
          %374 = dma.hbm_to_vmem [thread:$0]  %s369, 128, %s372, %s360
        $region48: #{tpu_custom_call.1} parent=43 // pred_fallthru
          _
        // Predicated region
        $region49: #{tpu_custom_call.1} parent=43 // pred_check
          %p375 = pneg %p95
        $region50: #{tpu_custom_call.1} parent=43 // pred_check_branch
          %377 = sbr.rel (%p375) target = $region52
        $region51: #{tpu_custom_call.1} parent=43 // pred_region
          %s378 = sand.u32 %s26, 1
          %s379 = scalar_lea.sflag [#allocation10], %s378
          %s380 = sand.u32 %s85, 1
          %s381 = smul.addr %s380, 8
          %s382 = scalar_lea.vmem [#allocation9], %s381
          %s384 = ssub.s32 128, 128
          %385 = vsyncadd %s379, %s384
          %s386 = sadd.s32 %s35, %s33
          %s387 = smul.addr %s386, 128
          %s388 = scalar_lea.hbm %s1, %s387
          %s390 = sshll.u32 %s382, 4
          %s391 = int_to_ptr.vmem [resolvable:$true] %s390
          %393 = dma.hbm_to_vmem [thread:$0]  %s388, 128, %s391, %s379
        $region52: #{tpu_custom_call.1} parent=43 // pred_fallthru
          _
      $region44: #{tpu_custom_call.1} parent=5 // pred_fallthru
        _
      %p394 = scmp.le.s32.totalorder 1, %s26
      %p395 = scmp.lt.s32.totalorder %s26, 3
      %p396 = pnand %p394, %p395
      %p397 = pneg %p396
      // Predicated region
      $region53: #{tpu_custom_call.1} parent=5 // pred_check
        _
      $region54: #{tpu_custom_call.1} parent=5 // pred_check_branch
        %399 = sbr.rel (%p396) target = $region56
      $region55: #{tpu_custom_call.1} parent=5 // pred_region
        %s400 = ssub.s32 %s26, 1
        %s401 = sand.u32 %s60, 1
        %s402 = scalar_lea.sflag [#allocation7], %s401
        %s403 = sand.u32 %s60, 1
        %s404 = smul.addr %s403, 8
        %s405 = scalar_lea.vmem [#allocation6], %s404
        // Predicated region
        $region57: #{tpu_custom_call.1} parent=55 // pred_check
          %p406 = pneg %p73
        $region58: #{tpu_custom_call.1} parent=55 // pred_check_branch
          %408 = sbr.rel (%p406) target = $region60
        $region59: #{tpu_custom_call.1} parent=55 // pred_region
          %409 = dma.done %s402, 128
        $region60: #{tpu_custom_call.1} parent=55 // pred_fallthru
          _
        %s410 = sand.u32 %s31, 1
        %s411 = scalar_lea.sflag [#allocation10], %s410
        %s412 = sand.u32 %s88, 1
        %s413 = smul.addr %s412, 8
        %s414 = scalar_lea.vmem [#allocation9], %s413
        // Predicated region
        $region61: #{tpu_custom_call.1} parent=55 // pred_check
          %p415 = pneg %p101
        $region62: #{tpu_custom_call.1} parent=55 // pred_check_branch
          %417 = sbr.rel (%p415) target = $region64
        $region63: #{tpu_custom_call.1} parent=55 // pred_region
          %418 = dma.done %s411, 128
        $region64: #{tpu_custom_call.1} parent=55 // pred_fallthru
          _
        // Predicated region
        $region65: #{tpu_custom_call.1} parent=55 // pred_check
          %p419 = pneg %p122
        $region66: #{tpu_custom_call.1} parent=55 // pred_check_branch
          %421 = sbr.rel (%p419) target = $region68
        $region67: #{tpu_custom_call.1} parent=55 // pred_region
          %422 = dma.done [#allocation10], 256
        $region68: #{tpu_custom_call.1} parent=55 // pred_fallthru
          _
        // Predicated region
        $region69: #{tpu_custom_call.1} parent=55 // pred_check
          %p423 = pneg %p143
        $region70: #{tpu_custom_call.1} parent=55 // pred_check_branch
          %425 = sbr.rel (%p423) target = $region72
        $region71: #{tpu_custom_call.1} parent=55 // pred_region
          %426 = dma.done [#allocation13], 256
        $region72: #{tpu_custom_call.1} parent=55 // pred_fallthru
          _
        // Predicated region
        $region73: #{tpu_custom_call.1} parent=55 // pred_check
          %p427 = pneg %p164
        $region74: #{tpu_custom_call.1} parent=55 // pred_check_branch
          %429 = sbr.rel (%p427) target = $region76
        $region75: #{tpu_custom_call.1} parent=55 // pred_region
          %430 = dma.done [#allocation13], 256
        $region76: #{tpu_custom_call.1} parent=55 // pred_fallthru
          _
        // Predicated region
        $region77: #{tpu_custom_call.1} parent=55 // pred_check
          %p431 = pneg %p206
        $region78: #{tpu_custom_call.1} parent=55 // pred_check_branch
          %433 = sbr.rel (%p431) target = $region80
        $region79: #{tpu_custom_call.1} parent=55 // pred_region
          %434 = dma.done [#allocation16], 256
        $region80: #{tpu_custom_call.1} parent=55 // pred_fallthru
          _
        %s435 = sand.u32 %s60, 1
        %s436 = scalar_lea.sflag [#allocation7], %s435
        %s437 = sand.u32 %s60, 1
        %s438 = smul.addr %s437, 8
        %s439 = scalar_lea.vmem [#allocation6], %s438
        %p440 = pneg %p73
        %p441 = pneg %p70
        %s442 = sand.u32 %s31, 1
        %s443 = scalar_lea.sflag [#allocation10], %s442
        %s444 = sand.u32 %s88, 1
        %s445 = smul.addr %s444, 8
        %s446 = scalar_lea.vmem [#allocation9], %s445
        %p447 = pneg %p101
        %p448 = pneg %p98
        %p449 = pneg %p122
        %p450 = pneg %p119
        %p451 = pneg %p143
        %p452 = pneg %p140
        %p453 = pneg %p164
        %p454 = pneg %p161
        %p455 = pneg %p185
        %p456 = pneg %p182
        %p457 = pneg %p206
        %p458 = pneg %p203
        %p459 = pneg %p227
        %p460 = pneg %p224
        %p461 = pneg %p248
        %p462 = pneg %p245
        %p463 = pneg %p276
        %p464 = pneg %p273
        %s465 = sand.u32 %s263, 1
        %s466 = scalar_lea.sflag [#allocation8], %s465
        %s467 = sand.u32 %s263, 1
        %s468 = smul.addr %s467, 8
        %s469 = scalar_lea.vmem [#allocation17], %s468
        %p471 = scmp.eq.s32.totalorder %s38, 0
        // Predicated region
        $region81: #{tpu_custom_call.1} parent=55 // pred_check
          %p472 = pneg %p471
        $region82: #{tpu_custom_call.1} parent=55 // pred_check_branch
          %474 = sbr.rel (%p472) target = $region84
        $region83: #{tpu_custom_call.1} parent=55 // pred_region
          %v475 = vld [vmem:[%s405] sm:$0xff]
          %v476 = vld [vmem:[%s7] sm:$0x1]
          %v477 = vmul.f32 %v475, %v475
          %vm478 = vcmask 261120
          %v479 = vsel %vm478, %v477, 0.0
          %480 = vadd.xlane.f32.xlu0 %v479
          %v481 = vpop.xlane.xlu0 %480
          %v482 = vrcp.pop 32.0
          %v483 = vmul.f32 %v481, %v482
          %v484 = vadd.f32 %v483, 1e-06
          %v485 = vrsqrt.pop %v484
          %v486 = vmul.f32 %v475, %v485
          %v488 = vlaneseq
          %v489 = vshrl.u32 %v488, 7
          %v490 = vsub.s32 0, %v489
          %v491 = vrot.slane %v476, %v490
          %v493 = vmul.f32 %v486, %v491
          %v494 = vpack.c.bf16 %v493, %v493
          %v495 = vld [vmem:[#allocation11] sm:$0xf]
          %v496 = vld [vmem:[#allocation11 + $0x4] sm:$0xf]
          %v497 = vld [vmem:[#allocation11 + $0x8] sm:$0xf]
          %v498 = vld [vmem:[#allocation11 + $0xc] sm:$0xf]
          %v503 = vunpack.c.l.b16 %v495
          %v504 = vunpack.c.l.b16 %v496
          %v505 = vunpack.c.l.b16 %v497
          %v506 = vunpack.c.l.b16 %v498
          %v507 = vpack.c.b16 %v504, %v503
          %v508 = vpack.c.b16 %v506, %v505
          %v512 = vsel %vm478, %v494, 0
          %514 = vmatprep.subr.bf16.mxu0 0
          %515 = vmatpush1.bf16.msra.mxu0 %v507
          %516 = vmatprep.subr.bf16.mxu0 0
          %517 = vmatpush1.bf16.msra.mxu0 %v508
          %518 = vmatprep.subr.bf16.mxu0 0
          %519 = vmatpush1.bf16.msra.mxu0 0
          %520 = vmatprep.subr.bf16.mxu0 0
          %521 = vmatpush1.bf16.msra.mxu0 0
          %522 = vmatprep.subr.bf16.mxu0 0
          %523 = vmatpush1.bf16.msra.mxu0 0
          %524 = vmatprep.subr.bf16.mxu0 0
          %525 = vmatpush1.bf16.msra.mxu0 0
          %526 = vmatprep.subr.bf16.mxu0 0
          %527 = vmatpush1.bf16.msra.mxu0 0
          %528 = vmatprep.subr.bf16.mxu0 0
          %529 = vmatpush1.bf16.msra.mxu0 0
          %530 = vmatprep.subr.bf16.mxu0 0
          %531 = vmatpush1.bf16.msra.mxu0 0
          %532 = vmatprep.subr.bf16.mxu0 0
          %533 = vmatpush1.bf16.msra.mxu0 0
          %534 = vmatprep.subr.bf16.mxu0 0
          %535 = vmatpush1.bf16.msra.mxu0 0
          %536 = vmatprep.subr.bf16.mxu0 0
          %537 = vmatpush1.bf16.msra.mxu0 0
          %538 = vmatprep.subr.bf16.mxu0 0
          %539 = vmatpush1.bf16.msra.mxu0 0
          %540 = vmatprep.subr.bf16.mxu0 0
          %541 = vmatpush1.bf16.msra.mxu0 0
          %542 = vmatprep.subr.bf16.mxu0 0
          %543 = vmatpush1.bf16.msra.mxu0 0
          %544 = vmatprep.subr.bf16.mxu0 0
          %545 = vmatpush1.bf16.msra.mxu0 0
          %546 = vmatprep.mubr.bf16.mxu0 0
          %547 = vmatmul.mubr.bf16.gmra.mrb[0].mxu0 %v512
          %v548 = vpop.f32.mrb[0].mxu0
          %v549 = vadd.f32 0.0, %v548
          %v550 = vpop.f32.mrb[0].mxu0
          %v551 = vpop.f32.mrb[0].mxu0
          %v552 = vpop.f32.mrb[0].mxu0
          %553 = vdwg.mxu0
          %v554 = vmul.f32 %v549, 0.35355338
          %v555 = vpack.c.bf16 %v554, %v554
          %vm556 = vcmask 257024
          %557 = vst.msk [vmem:[#allocation2] sm:$0xf] %vm556, %v555
          %558 = vst.msk [vmem:[#allocation3] sm:$0xff] %vm478, 0.0
          %vm559 = vcmask 31744
          %560 = vst.msk [vmem:[#allocation4] sm:$0xff] %vm559, -1e+30
          %561 = vst.msk [vmem:[#allocation5] sm:$0xff] %vm559, 0.0
        $region84: #{tpu_custom_call.1} parent=55 // pred_fallthru
          _
        %s562 = smul.u32 %s38, 8
        %s563 = smul.u32 %s37, 8
        %s564 = sadd.s32 %s563, 7
        %p565 = scmp.le.s32.totalorder %s562, %s564
        // Predicated region
        $region85: #{tpu_custom_call.1} parent=55 // pred_check
          %p566 = pneg %p565
        $region86: #{tpu_custom_call.1} parent=55 // pred_check_branch
          %568 = sbr.rel (%p566) target = $region88
        $region87: #{tpu_custom_call.1} parent=55 // pred_region
          %v569 = vld [vmem:[%s414] sm:$0xff]
          %v570 = vld [vmem:[%s7] sm:$0x1]
          %v571 = vmul.f32 %v569, %v569
          %vm572 = vcmask 261120
          %v573 = vsel %vm572, %v571, 0.0
          %574 = vadd.xlane.f32.xlu0 %v573
          %v575 = vpop.xlane.xlu0 %574
          %v576 = vrcp.pop 32.0
          %v577 = vmul.f32 %v575, %v576
          %v578 = vadd.f32 %v577, 1e-06
          %v579 = vrsqrt.pop %v578
          %v580 = vmul.f32 %v569, %v579
          %v582 = vlaneseq
          %v583 = vshrl.u32 %v582, 7
          %v584 = vsub.s32 0, %v583
          %v585 = vrot.slane %v570, %v584
          %v587 = vmul.f32 %v580, %v585
          %v588 = vpack.c.bf16 %v587, %v587
          %v589 = vld [vmem:[#allocation12] sm:$0xf]
          %v590 = vld [vmem:[#allocation12 + $0x4] sm:$0xf]
          %v591 = vld [vmem:[#allocation12 + $0x8] sm:$0xf]
          %v592 = vld [vmem:[#allocation12 + $0xc] sm:$0xf]
          %v597 = vunpack.c.l.b16 %v589
          %v598 = vunpack.c.l.b16 %v590
          %v599 = vunpack.c.l.b16 %v591
          %v600 = vunpack.c.l.b16 %v592
          %v601 = vpack.c.b16 %v598, %v597
          %v602 = vpack.c.b16 %v600, %v599
          %v606 = vsel %vm572, %v588, 0
          %608 = vmatprep.subr.bf16.mxu0 0
          %609 = vmatpush1.bf16.msra.mxu0 %v601
          %610 = vmatprep.subr.bf16.mxu0 0
          %611 = vmatpush1.bf16.msra.mxu0 %v602
          %612 = vmatprep.subr.bf16.mxu0 0
          %613 = vmatpush1.bf16.msra.mxu0 0
          %614 = vmatprep.subr.bf16.mxu0 0
          %615 = vmatpush1.bf16.msra.mxu0 0
          %616 = vmatprep.subr.bf16.mxu0 0
          %617 = vmatpush1.bf16.msra.mxu0 0
          %618 = vmatprep.subr.bf16.mxu0 0
          %619 = vmatpush1.bf16.msra.mxu0 0
          %620 = vmatprep.subr.bf16.mxu0 0
          %621 = vmatpush1.bf16.msra.mxu0 0
          %622 = vmatprep.subr.bf16.mxu0 0
          %623 = vmatpush1.bf16.msra.mxu0 0
          %624 = vmatprep.subr.bf16.mxu0 0
          %625 = vmatpush1.bf16.msra.mxu0 0
          %626 = vmatprep.subr.bf16.mxu0 0
          %627 = vmatpush1.bf16.msra.mxu0 0
          %628 = vmatprep.subr.bf16.mxu0 0
          %629 = vmatpush1.bf16.msra.mxu0 0
          %630 = vmatprep.subr.bf16.mxu0 0
          %631 = vmatpush1.bf16.msra.mxu0 0
          %632 = vmatprep.subr.bf16.mxu0 0
          %633 = vmatpush1.bf16.msra.mxu0 0
          %634 = vmatprep.subr.bf16.mxu0 0
          %635 = vmatpush1.bf16.msra.mxu0 0
          %636 = vmatprep.subr.bf16.mxu0 0
          %637 = vmatpush1.bf16.msra.mxu0 0
          %638 = vmatprep.subr.bf16.mxu0 0
          %639 = vmatpush1.bf16.msra.mxu0 0
          %640 = vmatprep.mubr.bf16.mxu0 0
          %641 = vmatmul.mubr.bf16.gmra.mrb[0].mxu0 %v606
          %v642 = vpop.f32.mrb[0].mxu0
          %v643 = vadd.f32 0.0, %v642
          %v644 = vpop.f32.mrb[0].mxu0
          %v645 = vpop.f32.mrb[0].mxu0
          %v646 = vpop.f32.mrb[0].mxu0
          %647 = vdwg.mxu0
          %v648 = vpack.c.bf16 %v643, %v643
          %v649 = vlaneseq
          %v650 = vshrl.u32 %v649, 7
          %v651 = vstv %s563
          %v652 = vadd.s32 %v651, %v650
          %v653 = vlaneseq
          %v654 = vand.u32 %v653, 127
          %v655 = vstv %s562
          %v656 = vadd.s32 %v655, %v654
          %vm657 = vcmp.le.s32.totalorder %v656, %v652
          %v658 = vld [vmem:[#allocation2] sm:$0xf]
          %vm659 = vcmask 64512
          %v661 = vsel %vm659, %v658, 0
          %v664 = vsel %vm659, %v648, 0
          %666 = vmatprep.subr.bf16.mxu0 0
          %667 = vmatpush1.bf16.xpose.msra.mxu0 %v664
          %668 = vmatprep.subr.bf16.mxu0 0
          %669 = vmatpush1.bf16.xpose.msra.mxu0 0
          %670 = vmatprep.subr.bf16.mxu0 0
          %671 = vmatpush1.bf16.xpose.msra.mxu0 0
          %672 = vmatprep.subr.bf16.mxu0 0
          %673 = vmatpush1.bf16.xpose.msra.mxu0 0
          %674 = vmatprep.subr.bf16.mxu0 0
          %675 = vmatpush1.bf16.xpose.msra.mxu0 0
          %676 = vmatprep.subr.bf16.mxu0 0
          %677 = vmatpush1.bf16.xpose.msra.mxu0 0
          %678 = vmatprep.subr.bf16.mxu0 0
          %679 = vmatpush1.bf16.xpose.msra.mxu0 0
          %680 = vmatprep.subr.bf16.mxu0 0
          %681 = vmatpush1.bf16.xpose.msra.mxu0 0
          %682 = vmatprep.subr.bf16.mxu0 0
          %683 = vmatpush1.bf16.xpose.msra.mxu0 0
          %684 = vmatprep.subr.bf16.mxu0 0
          %685 = vmatpush1.bf16.xpose.msra.mxu0 0
          %686 = vmatprep.subr.bf16.mxu0 0
          %687 = vmatpush1.bf16.xpose.msra.mxu0 0
          %688 = vmatprep.subr.bf16.mxu0 0
          %689 = vmatpush1.bf16.xpose.msra.mxu0 0
          %690 = vmatprep.subr.bf16.mxu0 0
          %691 = vmatpush1.bf16.xpose.msra.mxu0 0
          %692 = vmatprep.subr.bf16.mxu0 0
          %693 = vmatpush1.bf16.xpose.msra.mxu0 0
          %694 = vmatprep.subr.bf16.mxu0 0
          %695 = vmatpush1.bf16.xpose.msra.mxu0 0
          %696 = vmatprep.subr.bf16.mxu0 0
          %697 = vmatpush1.bf16.xpose.msra.mxu0 0
          %698 = vmatprep.mubr.bf16.mxu0 0
          %699 = vmatmul.mubr.bf16.gmra.mrb[0].mxu0 %v661
          %v700 = vpop.f32.mrb[0].mxu0
          %v701 = vadd.f32 0.0, %v700
          %v702 = vpop.f32.mrb[0].mxu0
          %v703 = vpop.f32.mrb[0].mxu0
          %v704 = vpop.f32.mrb[0].mxu0
          %705 = vdwg.mxu0
          %v706 = vsel %vm657, %v701, -1e+30
          %v707 = vld [vmem:[#allocation4] sm:$0xff]
          %v708 = vsel %vm659, %v706, -inf
          %709 = vmax.xlane.f32.xlu0 %v708
          %v710 = vpop.xlane.xlu0 %709
          %v711 = vmax.f32 %v707, %v710
          %v712 = vsub.f32 %v707, %v711
          %v713 = vmul.f32 %v712, 1.442695
          %v714 = vpow.pop %v713
          %716 = vset.pattern.permute.xlu0 0
          %717 = vperm.xlu0 %716, %v711
          %v718 = vpop.permute.xlu0 %717
          %v720 = vsub.f32 %v706, %v718
          %v721 = vmul.f32 %v720, 1.442695
          %v722 = vpow.pop %v721
          %v723 = vld [vmem:[#allocation5] sm:$0xff]
          %v724 = vmul.f32 %v714, %v723
          %v725 = vsel %vm659, %v722, 0.0
          %726 = vadd.xlane.f32.xlu0 %v725
          %v727 = vpop.xlane.xlu0 %726
          %v728 = vadd.f32 %v724, %v727
          %vm729 = vcmask 7168
          %730 = vst.msk [vmem:[#allocation5] sm:$0xff] %vm729, %v728
          %v731 = vpack.c.bf16 %v722, %v722
          %733 = vrot.lane.b32.xlu0 %v648, 96
          %v734 = vpop.permute.xlu0 %733
          %v736 = vsel %vm659, %v731, 0
          %vm738 = vcmask 1043456
          %v740 = vsel %vm738, %v734, 0
          %742 = vmatprep.subr.bf16.mxu0 0
          %743 = vmatpush1.bf16.msra.mxu0 %v740
          %744 = vmatprep.subr.bf16.mxu0 0
          %745 = vmatpush1.bf16.msra.mxu0 0
          %746 = vmatprep.subr.bf16.mxu0 0
          %747 = vmatpush1.bf16.msra.mxu0 0
          %748 = vmatprep.subr.bf16.mxu0 0
          %749 = vmatpush1.bf16.msra.mxu0 0
          %750 = vmatprep.subr.bf16.mxu0 0
          %751 = vmatpush1.bf16.msra.mxu0 0
          %752 = vmatprep.subr.bf16.mxu0 0
          %753 = vmatpush1.bf16.msra.mxu0 0
          %754 = vmatprep.subr.bf16.mxu0 0
          %755 = vmatpush1.bf16.msra.mxu0 0
          %756 = vmatprep.subr.bf16.mxu0 0
          %757 = vmatpush1.bf16.msra.mxu0 0
          %758 = vmatprep.subr.bf16.mxu0 0
          %759 = vmatpush1.bf16.msra.mxu0 0
          %760 = vmatprep.subr.bf16.mxu0 0
          %761 = vmatpush1.bf16.msra.mxu0 0
          %762 = vmatprep.subr.bf16.mxu0 0
          %763 = vmatpush1.bf16.msra.mxu0 0
          %764 = vmatprep.subr.bf16.mxu0 0
          %765 = vmatpush1.bf16.msra.mxu0 0
          %766 = vmatprep.subr.bf16.mxu0 0
          %767 = vmatpush1.bf16.msra.mxu0 0
          %768 = vmatprep.subr.bf16.mxu0 0
          %769 = vmatpush1.bf16.msra.mxu0 0
          %770 = vmatprep.subr.bf16.mxu0 0
          %771 = vmatpush1.bf16.msra.mxu0 0
          %772 = vmatprep.subr.bf16.mxu0 0
          %773 = vmatpush1.bf16.msra.mxu0 0
          %774 = vmatprep.mubr.bf16.mxu0 0
          %775 = vmatmul.mubr.bf16.gmra.mrb[0].mxu0 %v736
          %v776 = vpop.f32.mrb[0].mxu0
          %v777 = vadd.f32 0.0, %v776
          %v778 = vpop.f32.mrb[0].mxu0
          %v779 = vpop.f32.mrb[0].mxu0
          %v780 = vpop.f32.mrb[0].mxu0
          %781 = vdwg.mxu0
          %v782 = vld [vmem:[#allocation3] sm:$0xff]
          %784 = vset.pattern.permute.xlu0 0
          %785 = vperm.xlu0 %784, %v714
          %v786 = vpop.permute.xlu0 %785
          %v788 = vmul.f32 %v786, %v782
          %v789 = vadd.f32 %v788, %v777
          %790 = vst.msk [vmem:[#allocation3] sm:$0xff] %vm659, %v789
          %791 = vst.msk [vmem:[#allocation4] sm:$0xff] %vm729, %v711
          %v792 = vld [vmem:[#allocation2] sm:$0xf]
          %v794 = vunpack.c.l.b16 %v792
          %v795 = vpack.c.b16 %v794, %v794
          %796 = vrot.lane.b32.xlu0 %v795, 120
          %v797 = vpop.permute.xlu0 %796
          %798 = vrot.lane.b32.xlu0 %v648, 120
          %v799 = vpop.permute.xlu0 %798
          %v801 = vsel %vm659, %v797, 0
          %v804 = vsel %vm659, %v799, 0
          %806 = vmatprep.subr.bf16.mxu0 0
          %807 = vmatpush1.bf16.xpose.msra.mxu0 %v804
          %808 = vmatprep.subr.bf16.mxu0 0
          %809 = vmatpush1.bf16.xpose.msra.mxu0 0
          %810 = vmatprep.subr.bf16.mxu0 0
          %811 = vmatpush1.bf16.xpose.msra.mxu0 0
          %812 = vmatprep.subr.bf16.mxu0 0
          %813 = vmatpush1.bf16.xpose.msra.mxu0 0
          %814 = vmatprep.subr.bf16.mxu0 0
          %815 = vmatpush1.bf16.xpose.msra.mxu0 0
          %816 = vmatprep.subr.bf16.mxu0 0
          %817 = vmatpush1.bf16.xpose.msra.mxu0 0
          %818 = vmatprep.subr.bf16.mxu0 0
          %819 = vmatpush1.bf16.xpose.msra.mxu0 0
          %820 = vmatprep.subr.bf16.mxu0 0
          %821 = vmatpush1.bf16.xpose.msra.mxu0 0
          %822 = vmatprep.subr.bf16.mxu0 0
          %823 = vmatpush1.bf16.xpose.msra.mxu0 0
          %824 = vmatprep.subr.bf16.mxu0 0
          %825 = vmatpush1.bf16.xpose.msra.mxu0 0
          %826 = vmatprep.subr.bf16.mxu0 0
          %827 = vmatpush1.bf16.xpose.msra.mxu0 0
          %828 = vmatprep.subr.bf16.mxu0 0
          %829 = vmatpush1.bf16.xpose.msra.mxu0 0
          %830 = vmatprep.subr.bf16.mxu0 0
          %831 = vmatpush1.bf16.xpose.msra.mxu0 0
          %832 = vmatprep.subr.bf16.mxu0 0
          %833 = vmatpush1.bf16.xpose.msra.mxu0 0
          %834 = vmatprep.subr.bf16.mxu0 0
          %835 = vmatpush1.bf16.xpose.msra.mxu0 0
          %836 = vmatprep.subr.bf16.mxu0 0
          %837 = vmatpush1.bf16.xpose.msra.mxu0 0
          %838 = vmatprep.mubr.bf16.mxu0 0
          %839 = vmatmul.mubr.bf16.gmra.mrb[0].mxu0 %v801
          %v840 = vpop.f32.mrb[0].mxu0
          %v841 = vadd.f32 0.0, %v840
          %v842 = vpop.f32.mrb[0].mxu0
          %v843 = vpop.f32.mrb[0].mxu0
          %v844 = vpop.f32.mrb[0].mxu0
          %845 = vdwg.mxu0
          %v846 = vsel %vm657, %v841, -1e+30
          %v847 = vld [vmem:[#allocation4] sm:$0xff]
          %v848 = vsel %vm659, %v846, -inf
          %849 = vmax.xlane.f32.xlu0 %v848
          %v850 = vpop.xlane.xlu0 %849
          %v851 = vmax.f32 %v847, %v850
          %v852 = vsub.f32 %v847, %v851
          %v853 = vmul.f32 %v852, 1.442695
          %v854 = vpow.pop %v853
          %856 = vset.pattern.permute.xlu0 1
          %857 = vperm.xlu0 %856, %v851
          %v858 = vpop.permute.xlu0 %857
          %v860 = vsub.f32 %v846, %v858
          %v861 = vmul.f32 %v860, 1.442695
          %v862 = vpow.pop %v861
          %v863 = vld [vmem:[#allocation5] sm:$0xff]
          %v864 = vmul.f32 %v854, %v863
          %v865 = vsel %vm659, %v862, 0.0
          %866 = vadd.xlane.f32.xlu0 %v865
          %v867 = vpop.xlane.xlu0 %866
          %v868 = vadd.f32 %v864, %v867
          %vm869 = vcmask 15368
          %870 = vst.msk [vmem:[#allocation5] sm:$0xff] %vm869, %v868
          %v871 = vpack.c.bf16 %v862, %v862
          %872 = vrot.lane.b32.xlu0 %v648, 88
          %v873 = vpop.permute.xlu0 %872
          %v875 = vsel %vm659, %v871, 0
          %v878 = vsel %vm738, %v873, 0
          %880 = vmatprep.subr.bf16.mxu0 0
          %881 = vmatpush1.bf16.msra.mxu0 %v878
          %882 = vmatprep.subr.bf16.mxu0 0
          %883 = vmatpush1.bf16.msra.mxu0 0
          %884 = vmatprep.subr.bf16.mxu0 0
          %885 = vmatpush1.bf16.msra.mxu0 0
          %886 = vmatprep.subr.bf16.mxu0 0
          %887 = vmatpush1.bf16.msra.mxu0 0
          %888 = vmatprep.subr.bf16.mxu0 0
          %889 = vmatpush1.bf16.msra.mxu0 0
          %890 = vmatprep.subr.bf16.mxu0 0
          %891 = vmatpush1.bf16.msra.mxu0 0
          %892 = vmatprep.subr.bf16.mxu0 0
          %893 = vmatpush1.bf16.msra.mxu0 0
          %894 = vmatprep.subr.bf16.mxu0 0
          %895 = vmatpush1.bf16.msra.mxu0 0
          %896 = vmatprep.subr.bf16.mxu0 0
          %897 = vmatpush1.bf16.msra.mxu0 0
          %898 = vmatprep.subr.bf16.mxu0 0
          %899 = vmatpush1.bf16.msra.mxu0 0
          %900 = vmatprep.subr.bf16.mxu0 0
          %901 = vmatpush1.bf16.msra.mxu0 0
          %902 = vmatprep.subr.bf16.mxu0 0
          %903 = vmatpush1.bf16.msra.mxu0 0
          %904 = vmatprep.subr.bf16.mxu0 0
          %905 = vmatpush1.bf16.msra.mxu0 0
          %906 = vmatprep.subr.bf16.mxu0 0
          %907 = vmatpush1.bf16.msra.mxu0 0
          %908 = vmatprep.subr.bf16.mxu0 0
          %909 = vmatpush1.bf16.msra.mxu0 0
          %910 = vmatprep.subr.bf16.mxu0 0
          %911 = vmatpush1.bf16.msra.mxu0 0
          %912 = vmatprep.mubr.bf16.mxu0 0
          %913 = vmatmul.mubr.bf16.gmra.mrb[0].mxu0 %v875
          %v914 = vpop.f32.mrb[0].mxu0
          %v915 = vadd.f32 0.0, %v914
          %v916 = vpop.f32.mrb[0].mxu0
          %v917 = vpop.f32.mrb[0].mxu0
          %v918 = vpop.f32.mrb[0].mxu0
          %919 = vdwg.mxu0
          %v920 = vld [vmem:[#allocation3] sm:$0xff]
          %922 = vset.pattern.permute.xlu0 1
          %923 = vperm.xlu0 %922, %v854
          %v924 = vpop.permute.xlu0 %923
          %v926 = vmul.f32 %v924, %v920
          %928 = vrot.lane.b32.xlu0 %v915, 8
          %v929 = vpop.permute.xlu0 %928
          %v931 = vadd.f32 %v926, %v929
          %vm932 = vcmask 130112
          %933 = vst.msk [vmem:[#allocation3] sm:$0xff] %vm932, %v931
          %934 = vst.msk [vmem:[#allocation4] sm:$0xff] %vm869, %v851
          %v935 = vld [vmem:[#allocation2] sm:$0xf]
          %v937 = vunpack.c.l.b16 %v935
          %v938 = vpack.c.b16 %v937, %v937
          %939 = vrot.lane.b32.xlu0 %v938, 112
          %v940 = vpop.permute.xlu0 %939
          %941 = vrot.lane.b32.xlu0 %v648, 112
          %v942 = vpop.permute.xlu0 %941
          %v944 = vsel %vm659, %v940, 0
          %v947 = vsel %vm659, %v942, 0
          %949 = vmatprep.subr.bf16.mxu0 0
          %950 = vmatpush1.bf16.xpose.msra.mxu0 %v947
          %951 = vmatprep.subr.bf16.mxu0 0
          %952 = vmatpush1.bf16.xpose.msra.mxu0 0
          %953 = vmatprep.subr.bf16.mxu0 0
          %954 = vmatpush1.bf16.xpose.msra.mxu0 0
          %955 = vmatprep.subr.bf16.mxu0 0
          %956 = vmatpush1.bf16.xpose.msra.mxu0 0
          %957 = vmatprep.subr.bf16.mxu0 0
          %958 = vmatpush1.bf16.xpose.msra.mxu0 0
          %959 = vmatprep.subr.bf16.mxu0 0
          %960 = vmatpush1.bf16.xpose.msra.mxu0 0
          %961 = vmatprep.subr.bf16.mxu0 0
          %962 = vmatpush1.bf16.xpose.msra.mxu0 0
          %963 = vmatprep.subr.bf16.mxu0 0
          %964 = vmatpush1.bf16.xpose.msra.mxu0 0
          %965 = vmatprep.subr.bf16.mxu0 0
          %966 = vmatpush1.bf16.xpose.msra.mxu0 0
          %967 = vmatprep.subr.bf16.mxu0 0
          %968 = vmatpush1.bf16.xpose.msra.mxu0 0
          %969 = vmatprep.subr.bf16.mxu0 0
          %970 = vmatpush1.bf16.xpose.msra.mxu0 0
          %971 = vmatprep.subr.bf16.mxu0 0
          %972 = vmatpush1.bf16.xpose.msra.mxu0 0
          %973 = vmatprep.subr.bf16.mxu0 0
          %974 = vmatpush1.bf16.xpose.msra.mxu0 0
          %975 = vmatprep.subr.bf16.mxu0 0
          %976 = vmatpush1.bf16.xpose.msra.mxu0 0
          %977 = vmatprep.subr.bf16.mxu0 0
          %978 = vmatpush1.bf16.xpose.msra.mxu0 0
          %979 = vmatprep.subr.bf16.mxu0 0
          %980 = vmatpush1.bf16.xpose.msra.mxu0 0
          %981 = vmatprep.mubr.bf16.mxu0 0
          %982 = vmatmul.mubr.bf16.gmra.mrb[0].mxu0 %v944
          %v983 = vpop.f32.mrb[0].mxu0
          %v984 = vadd.f32 0.0, %v983
          %v985 = vpop.f32.mrb[0].mxu0
          %v986 = vpop.f32.mrb[0].mxu0
          %v987 = vpop.f32.mrb[0].mxu0
          %988 = vdwg.mxu0
          %v989 = vsel %vm657, %v984, -1e+30
          %v990 = vld [vmem:[#allocation4] sm:$0xff]
          %v991 = vsel %vm659, %v989, -inf
          %992 = vmax.xlane.f32.xlu0 %v991
          %v993 = vpop.xlane.xlu0 %992
          %v994 = vmax.f32 %v990, %v993
          %v995 = vsub.f32 %v990, %v994
          %v996 = vmul.f32 %v995, 1.442695
          %v997 = vpow.pop %v996
          %999 = vset.pattern.permute.xlu0 2
          %1000 = vperm.xlu0 %999, %v994
          %v1001 = vpop.permute.xlu0 %1000
          %v1003 = vsub.f32 %v989, %v1001
          %v1004 = vmul.f32 %v1003, 1.442695
          %v1005 = vpow.pop %v1004
          %v1006 = vld [vmem:[#allocation5] sm:$0xff]
          %v1007 = vmul.f32 %v997, %v1006
          %v1008 = vsel %vm659, %v1005, 0.0
          %1009 = vadd.xlane.f32.xlu0 %v1008
          %v1010 = vpop.xlane.xlu0 %1009
          %v1011 = vadd.f32 %v1007, %v1010
          %vm1012 = vcmask 23568
          %1013 = vst.msk [vmem:[#allocation5] sm:$0xff] %vm1012, %v1011
          %v1014 = vpack.c.bf16 %v1005, %v1005
          %1015 = vrot.lane.b32.xlu0 %v648, 80
          %v1016 = vpop.permute.xlu0 %1015
          %v1018 = vsel %vm659, %v1014, 0
          %v1021 = vsel %vm738, %v1016, 0
          %1023 = vmatprep.subr.bf16.mxu0 0
          %1024 = vmatpush1.bf16.msra.mxu0 %v1021
          %1025 = vmatprep.subr.bf16.mxu0 0
          %1026 = vmatpush1.bf16.msra.mxu0 0
          %1027 = vmatprep.subr.bf16.mxu0 0
          %1028 = vmatpush1.bf16.msra.mxu0 0
          %1029 = vmatprep.subr.bf16.mxu0 0
          %1030 = vmatpush1.bf16.msra.mxu0 0
          %1031 = vmatprep.subr.bf16.mxu0 0
          %1032 = vmatpush1.bf16.msra.mxu0 0
          %1033 = vmatprep.subr.bf16.mxu0 0
          %1034 = vmatpush1.bf16.msra.mxu0 0
          %1035 = vmatprep.subr.bf16.mxu0 0
          %1036 = vmatpush1.bf16.msra.mxu0 0
          %1037 = vmatprep.subr.bf16.mxu0 0
          %1038 = vmatpush1.bf16.msra.mxu0 0
          %1039 = vmatprep.subr.bf16.mxu0 0
          %1040 = vmatpush1.bf16.msra.mxu0 0
          %1041 = vmatprep.subr.bf16.mxu0 0
          %1042 = vmatpush1.bf16.msra.mxu0 0
          %1043 = vmatprep.subr.bf16.mxu0 0
          %1044 = vmatpush1.bf16.msra.mxu0 0
          %1045 = vmatprep.subr.bf16.mxu0 0
          %1046 = vmatpush1.bf16.msra.mxu0 0
          %1047 = vmatprep.subr.bf16.mxu0 0
          %1048 = vmatpush1.bf16.msra.mxu0 0
          %1049 = vmatprep.subr.bf16.mxu0 0
          %1050 = vmatpush1.bf16.msra.mxu0 0
          %1051 = vmatprep.subr.bf16.mxu0 0
          %1052 = vmatpush1.bf16.msra.mxu0 0
          %1053 = vmatprep.subr.bf16.mxu0 0
          %1054 = vmatpush1.bf16.msra.mxu0 0
          %1055 = vmatprep.mubr.bf16.mxu0 0
          %1056 = vmatmul.mubr.bf16.gmra.mrb[0].mxu0 %v1018
          %v1057 = vpop.f32.mrb[0].mxu0
          %v1058 = vadd.f32 0.0, %v1057
          %v1059 = vpop.f32.mrb[0].mxu0
          %v1060 = vpop.f32.mrb[0].mxu0
          %v1061 = vpop.f32.mrb[0].mxu0
          %1062 = vdwg.mxu0
          %v1063 = vld [vmem:[#allocation3] sm:$0xff]
          %1065 = vset.pattern.permute.xlu0 2
          %1066 = vperm.xlu0 %1065, %v997
          %v1067 = vpop.permute.xlu0 %1066
          %v1069 = vmul.f32 %v1067, %v1063
          %1071 = vrot.lane.b32.xlu0 %v1058, 16
          %v1072 = vpop.permute.xlu0 %1071
          %v1074 = vadd.f32 %v1069, %v1072
          %vm1075 = vcmask 195712
          %1076 = vst.msk [vmem:[#allocation3] sm:$0xff] %vm1075, %v1074
          %1077 = vst.msk [vmem:[#allocation4] sm:$0xff] %vm1012, %v994
          %v1078 = vld [vmem:[#allocation2] sm:$0xf]
          %v1080 = vunpack.c.l.b16 %v1078
          %v1081 = vpack.c.b16 %v1080, %v1080
          %1082 = vrot.lane.b32.xlu0 %v1081, 104
          %v1083 = vpop.permute.xlu0 %1082
          %1084 = vrot.lane.b32.xlu0 %v648, 104
          %v1085 = vpop.permute.xlu0 %1084
          %v1087 = vsel %vm659, %v1083, 0
          %v1090 = vsel %vm659, %v1085, 0
          %1092 = vmatprep.subr.bf16.mxu0 0
          %1093 = vmatpush1.bf16.xpose.msra.mxu0 %v1090
          %1094 = vmatprep.subr.bf16.mxu0 0
          %1095 = vmatpush1.bf16.xpose.msra.mxu0 0
          %1096 = vmatprep.subr.bf16.mxu0 0
          %1097 = vmatpush1.bf16.xpose.msra.mxu0 0
          %1098 = vmatprep.subr.bf16.mxu0 0
          %1099 = vmatpush1.bf16.xpose.msra.mxu0 0
          %1100 = vmatprep.subr.bf16.mxu0 0
          %1101 = vmatpush1.bf16.xpose.msra.mxu0 0
          %1102 = vmatprep.subr.bf16.mxu0 0
          %1103 = vmatpush1.bf16.xpose.msra.mxu0 0
          %1104 = vmatprep.subr.bf16.mxu0 0
          %1105 = vmatpush1.bf16.xpose.msra.mxu0 0
          %1106 = vmatprep.subr.bf16.mxu0 0
          %1107 = vmatpush1.bf16.xpose.msra.mxu0 0
          %1108 = vmatprep.subr.bf16.mxu0 0
          %1109 = vmatpush1.bf16.xpose.msra.mxu0 0
          %1110 = vmatprep.subr.bf16.mxu0 0
          %1111 = vmatpush1.bf16.xpose.msra.mxu0 0
          %1112 = vmatprep.subr.bf16.mxu0 0
          %1113 = vmatpush1.bf16.xpose.msra.mxu0 0
          %1114 = vmatprep.subr.bf16.mxu0 0
          %1115 = vmatpush1.bf16.xpose.msra.mxu0 0
          %1116 = vmatprep.subr.bf16.mxu0 0
          %1117 = vmatpush1.bf16.xpose.msra.mxu0 0
          %1118 = vmatprep.subr.bf16.mxu0 0
          %1119 = vmatpush1.bf16.xpose.msra.mxu0 0
          %1120 = vmatprep.subr.bf16.mxu0 0
          %1121 = vmatpush1.bf16.xpose.msra.mxu0 0
          %1122 = vmatprep.subr.bf16.mxu0 0
          %1123 = vmatpush1.bf16.xpose.msra.mxu0 0
          %1124 = vmatprep.mubr.bf16.mxu0 0
          %1125 = vmatmul.mubr.bf16.gmra.mrb[0].mxu0 %v1087
          %v1126 = vpop.f32.mrb[0].mxu0
          %v1127 = vadd.f32 0.0, %v1126
          %v1128 = vpop.f32.mrb[0].mxu0
          %v1129 = vpop.f32.mrb[0].mxu0
          %v1130 = vpop.f32.mrb[0].mxu0
          %1131 = vdwg.mxu0
          %v1132 = vsel %vm657, %v1127, -1e+30
          %v1133 = vld [vmem:[#allocation4] sm:$0xff]
          %v1134 = vsel %vm659, %v1132, -inf
          %1135 = vmax.xlane.f32.xlu0 %v1134
          %v1136 = vpop.xlane.xlu0 %1135
          %v1137 = vmax.f32 %v1133, %v1136
          %v1138 = vsub.f32 %v1133, %v1137
          %v1139 = vmul.f32 %v1138, 1.442695
          %v1140 = vpow.pop %v1139
          %1142 = vset.pattern.permute.xlu0 3
          %1143 = vperm.xlu0 %1142, %v1137
          %v1144 = vpop.permute.xlu0 %1143
          %v1146 = vsub.f32 %v1132, %v1144
          %v1147 = vmul.f32 %v1146, 1.442695
          %v1148 = vpow.pop %v1147
          %v1149 = vld [vmem:[#allocation5] sm:$0xff]
          %v1150 = vmul.f32 %v1140, %v1149
          %v1151 = vsel %vm659, %v1148, 0.0
          %1152 = vadd.xlane.f32.xlu0 %v1151
          %v1153 = vpop.xlane.xlu0 %1152
          %v1154 = vadd.f32 %v1150, %v1153
          %vm1155 = vcmask 31768
          %1156 = vst.msk [vmem:[#allocation5] sm:$0xff] %vm1155, %v1154
          %v1157 = vpack.c.bf16 %v1148, %v1148
          %1158 = vrot.lane.b32.xlu0 %v648, 72
          %v1159 = vpop.permute.xlu0 %1158
          %v1161 = vsel %vm659, %v1157, 0
          %v1164 = vsel %vm738, %v1159, 0
          %1166 = vmatprep.subr.bf16.mxu0 0
          %1167 = vmatpush1.bf16.msra.mxu0 %v1164
          %1168 = vmatprep.subr.bf16.mxu0 0
          %1169 = vmatpush1.bf16.msra.mxu0 0
          %1170 = vmatprep.subr.bf16.mxu0 0
          %1171 = vmatpush1.bf16.msra.mxu0 0
          %1172 = vmatprep.subr.bf16.mxu0 0
          %1173 = vmatpush1.bf16.msra.mxu0 0
          %1174 = vmatprep.subr.bf16.mxu0 0
          %1175 = vmatpush1.bf16.msra.mxu0 0
          %1176 = vmatprep.subr.bf16.mxu0 0
          %1177 = vmatpush1.bf16.msra.mxu0 0
          %1178 = vmatprep.subr.bf16.mxu0 0
          %1179 = vmatpush1.bf16.msra.mxu0 0
          %1180 = vmatprep.subr.bf16.mxu0 0
          %1181 = vmatpush1.bf16.msra.mxu0 0
          %1182 = vmatprep.subr.bf16.mxu0 0
          %1183 = vmatpush1.bf16.msra.mxu0 0
          %1184 = vmatprep.subr.bf16.mxu0 0
          %1185 = vmatpush1.bf16.msra.mxu0 0
          %1186 = vmatprep.subr.bf16.mxu0 0
          %1187 = vmatpush1.bf16.msra.mxu0 0
          %1188 = vmatprep.subr.bf16.mxu0 0
          %1189 = vmatpush1.bf16.msra.mxu0 0
          %1190 = vmatprep.subr.bf16.mxu0 0
          %1191 = vmatpush1.bf16.msra.mxu0 0
          %1192 = vmatprep.subr.bf16.mxu0 0
          %1193 = vmatpush1.bf16.msra.mxu0 0
          %1194 = vmatprep.subr.bf16.mxu0 0
          %1195 = vmatpush1.bf16.msra.mxu0 0
          %1196 = vmatprep.subr.bf16.mxu0 0
          %1197 = vmatpush1.bf16.msra.mxu0 0
          %1198 = vmatprep.mubr.bf16.mxu0 0
          %1199 = vmatmul.mubr.bf16.gmra.mrb[0].mxu0 %v1161
          %v1200 = vpop.f32.mrb[0].mxu0
          %v1201 = vadd.f32 0.0, %v1200
          %v1202 = vpop.f32.mrb[0].mxu0
          %v1203 = vpop.f32.mrb[0].mxu0
          %v1204 = vpop.f32.mrb[0].mxu0
          %1205 = vdwg.mxu0
          %v1206 = vld [vmem:[#allocation3] sm:$0xff]
          %1208 = vset.pattern.permute.xlu0 3
          %1209 = vperm.xlu0 %1208, %v1140
          %v1210 = vpop.permute.xlu0 %1209
          %v1212 = vmul.f32 %v1210, %v1206
          %1214 = vrot.lane.b32.xlu0 %v1201, 24
          %v1215 = vpop.permute.xlu0 %1214
          %v1217 = vadd.f32 %v1212, %v1215
          %vm1218 = vcmask 261312
          %1219 = vst.msk [vmem:[#allocation3] sm:$0xff] %vm1218, %v1217
          %1220 = vst.msk [vmem:[#allocation4] sm:$0xff] %vm1155, %v1137
        $region88: #{tpu_custom_call.1} parent=55 // pred_fallthru
          _
        // Predicated region
        $region89: #{tpu_custom_call.1} parent=55 // pred_check
          %p1221 = pneg %p471
        $region90: #{tpu_custom_call.1} parent=55 // pred_check_branch
          %1223 = sbr.rel (%p1221) target = $region92
        $region91: #{tpu_custom_call.1} parent=55 // pred_region
          %v1224 = vld [vmem:[#allocation5] sm:$0xff]
          %v1225 = vrcp.pop %v1224
          %v1226 = vld [vmem:[#allocation3] sm:$0xff]
          %1228 = vset.pattern.permute.xlu0 0
          %1229 = vperm.xlu0 %1228, %v1225
          %v1230 = vpop.permute.xlu0 %1229
          %v1232 = vmul.f32 %v1226, %v1230
          %vm1233 = vcmask 64512
          %1234 = vst.msk [vmem:[#allocation3] sm:$0xff] %vm1233, %v1232
          %v1235 = vld [vmem:[#allocation5] sm:$0xff]
          %v1236 = vrcp.pop %v1235
          %v1237 = vld [vmem:[#allocation3] sm:$0xff]
          %1239 = vset.pattern.permute.xlu0 1
          %1240 = vperm.xlu0 %1239, %v1236
          %v1241 = vpop.permute.xlu0 %1240
          %v1243 = vmul.f32 %v1237, %v1241
          %vm1244 = vcmask 130112
          %1245 = vst.msk [vmem:[#allocation3] sm:$0xff] %vm1244, %v1243
          %v1246 = vld [vmem:[#allocation5] sm:$0xff]
          %v1247 = vrcp.pop %v1246
          %v1248 = vld [vmem:[#allocation3] sm:$0xff]
          %1250 = vset.pattern.permute.xlu0 2
          %1251 = vperm.xlu0 %1250, %v1247
          %v1252 = vpop.permute.xlu0 %1251
          %v1254 = vmul.f32 %v1248, %v1252
          %vm1255 = vcmask 195712
          %1256 = vst.msk [vmem:[#allocation3] sm:$0xff] %vm1255, %v1254
          %v1257 = vld [vmem:[#allocation5] sm:$0xff]
          %v1258 = vrcp.pop %v1257
          %v1259 = vld [vmem:[#allocation3] sm:$0xff]
          %1261 = vset.pattern.permute.xlu0 3
          %1262 = vperm.xlu0 %1261, %v1258
          %v1263 = vpop.permute.xlu0 %1262
          %v1265 = vmul.f32 %v1259, %v1263
          %vm1266 = vcmask 261312
          %1267 = vst.msk [vmem:[#allocation3] sm:$0xff] %vm1266, %v1265
          %v1268 = vld [vmem:[#allocation3] sm:$0xff]
          %v1269 = vpack.c.bf16 %v1268, %v1268
          %v1270 = vld [vmem:[#allocation14] sm:$0xf]
          %v1271 = vld [vmem:[#allocation14 + $0x4] sm:$0xf]
          %v1272 = vld [vmem:[#allocation14 + $0x8] sm:$0xf]
          %v1273 = vld [vmem:[#allocation14 + $0xc] sm:$0xf]
          %v1278 = vunpack.c.l.b16 %v1270
          %v1279 = vunpack.c.l.b16 %v1271
          %v1280 = vunpack.c.l.b16 %v1272
          %v1281 = vunpack.c.l.b16 %v1273
          %v1282 = vpack.c.b16 %v1279, %v1278
          %v1283 = vpack.c.b16 %v1281, %v1280
          %vm1286 = vcmask 261120
          %v1288 = vsel %vm1286, %v1269, 0
          %1290 = vmatprep.subr.bf16.mxu0 0
          %1291 = vmatpush1.bf16.msra.mxu0 %v1282
          %1292 = vmatprep.subr.bf16.mxu0 0
          %1293 = vmatpush1.bf16.msra.mxu0 %v1283
          %1294 = vmatprep.subr.bf16.mxu0 0
          %1295 = vmatpush1.bf16.msra.mxu0 0
          %1296 = vmatprep.subr.bf16.mxu0 0
          %1297 = vmatpush1.bf16.msra.mxu0 0
          %1298 = vmatprep.subr.bf16.mxu0 0
          %1299 = vmatpush1.bf16.msra.mxu0 0
          %1300 = vmatprep.subr.bf16.mxu0 0
          %1301 = vmatpush1.bf16.msra.mxu0 0
          %1302 = vmatprep.subr.bf16.mxu0 0
          %1303 = vmatpush1.bf16.msra.mxu0 0
          %1304 = vmatprep.subr.bf16.mxu0 0
          %1305 = vmatpush1.bf16.msra.mxu0 0
          %1306 = vmatprep.subr.bf16.mxu0 0
          %1307 = vmatpush1.bf16.msra.mxu0 0
          %1308 = vmatprep.subr.bf16.mxu0 0
          %1309 = vmatpush1.bf16.msra.mxu0 0
          %1310 = vmatprep.subr.bf16.mxu0 0
          %1311 = vmatpush1.bf16.msra.mxu0 0
          %1312 = vmatprep.subr.bf16.mxu0 0
          %1313 = vmatpush1.bf16.msra.mxu0 0
          %1314 = vmatprep.subr.bf16.mxu0 0
          %1315 = vmatpush1.bf16.msra.mxu0 0
          %1316 = vmatprep.subr.bf16.mxu0 0
          %1317 = vmatpush1.bf16.msra.mxu0 0
          %1318 = vmatprep.subr.bf16.mxu0 0
          %1319 = vmatpush1.bf16.msra.mxu0 0
          %1320 = vmatprep.subr.bf16.mxu0 0
          %1321 = vmatpush1.bf16.msra.mxu0 0
          %1322 = vmatprep.mubr.bf16.mxu0 0
          %1323 = vmatmul.mubr.bf16.gmra.mrb[0].mxu0 %v1288
          %v1324 = vpop.f32.mrb[0].mxu0
          %v1325 = vadd.f32 0.0, %v1324
          %v1326 = vpop.f32.mrb[0].mxu0
          %v1327 = vpop.f32.mrb[0].mxu0
          %v1328 = vpop.f32.mrb[0].mxu0
          %1329 = vdwg.mxu0
          %v1330 = vld [vmem:[%s405] sm:$0xff]
          %v1331 = vadd.f32 %v1330, %v1325
          %v1332 = vld [vmem:[%s8] sm:$0x1]
          %v1333 = vmul.f32 %v1331, %v1331
          %v1334 = vsel %vm1286, %v1333, 0.0
          %1335 = vadd.xlane.f32.xlu0 %v1334
          %v1336 = vpop.xlane.xlu0 %1335
          %v1337 = vrcp.pop 32.0
          %v1338 = vmul.f32 %v1336, %v1337
          %v1339 = vadd.f32 %v1338, 1e-06
          %v1340 = vrsqrt.pop %v1339
          %v1341 = vmul.f32 %v1331, %v1340
          %v1343 = vlaneseq
          %v1344 = vshrl.u32 %v1343, 7
          %v1345 = vsub.s32 0, %v1344
          %v1346 = vrot.slane %v1332, %v1345
          %v1348 = vmul.f32 %v1341, %v1346
          %v1349 = vpack.c.bf16 %v1348, %v1348
          %v1350 = vld [vmem:[%s5] sm:$0xf]
          %v1351 = vld [vmem:[%s5 + $0x4] sm:$0xf]
          %v1352 = vld [vmem:[%s5 + $0x8] sm:$0xf]
          %v1353 = vld [vmem:[%s5 + $0xc] sm:$0xf]
          %v1358 = vunpack.c.l.b16 %v1350
          %v1359 = vunpack.c.l.b16 %v1351
          %v1360 = vunpack.c.l.b16 %v1352
          %v1361 = vunpack.c.l.b16 %v1353
          %v1362 = vpack.c.b16 %v1359, %v1358
          %v1363 = vpack.c.b16 %v1361, %v1360
          %v1367 = vsel %vm1286, %v1349, 0
          %1369 = vmatprep.subr.bf16.mxu0 0
          %1370 = vmatpush1.bf16.msra.mxu0 %v1362
          %1371 = vmatprep.subr.bf16.mxu0 0
          %1372 = vmatpush1.bf16.msra.mxu0 %v1363
          %1373 = vmatprep.subr.bf16.mxu0 0
          %1374 = vmatpush1.bf16.msra.mxu0 0
          %1375 = vmatprep.subr.bf16.mxu0 0
          %1376 = vmatpush1.bf16.msra.mxu0 0
          %1377 = vmatprep.subr.bf16.mxu0 0
          %1378 = vmatpush1.bf16.msra.mxu0 0
          %1379 = vmatprep.subr.bf16.mxu0 0
          %1380 = vmatpush1.bf16.msra.mxu0 0
          %1381 = vmatprep.subr.bf16.mxu0 0
          %1382 = vmatpush1.bf16.msra.mxu0 0
          %1383 = vmatprep.subr.bf16.mxu0 0
          %1384 = vmatpush1.bf16.msra.mxu0 0
          %1385 = vmatprep.subr.bf16.mxu0 0
          %1386 = vmatpush1.bf16.msra.mxu0 0
          %1387 = vmatprep.subr.bf16.mxu0 0
          %1388 = vmatpush1.bf16.msra.mxu0 0
          %1389 = vmatprep.subr.bf16.mxu0 0
          %1390 = vmatpush1.bf16.msra.mxu0 0
          %1391 = vmatprep.subr.bf16.mxu0 0
          %1392 = vmatpush1.bf16.msra.mxu0 0
          %1393 = vmatprep.subr.bf16.mxu0 0
          %1394 = vmatpush1.bf16.msra.mxu0 0
          %1395 = vmatprep.subr.bf16.mxu0 0
          %1396 = vmatpush1.bf16.msra.mxu0 0
          %1397 = vmatprep.subr.bf16.mxu0 0
          %1398 = vmatpush1.bf16.msra.mxu0 0
          %1399 = vmatprep.subr.bf16.mxu0 0
          %1400 = vmatpush1.bf16.msra.mxu0 0
          %1401 = vmatprep.mubr.bf16.mxu0 0
          %1402 = vmatmul.mubr.bf16.gmra.mrb[0].mxu0 %v1367
          %v1403 = vpop.f32.mrb[0].mxu0
          %v1404 = vadd.f32 0.0, %v1403
          %v1405 = vpop.f32.mrb[0].mxu0
          %v1406 = vpop.f32.mrb[0].mxu0
          %v1407 = vpop.f32.mrb[0].mxu0
          %1408 = vdwg.mxu0
          %v1409 = vxor.u32 %v1404, 2147483648
          %v1410 = vmul.f32 %v1409, 1.442695
          %v1411 = vpow.pop %v1410
          %v1412 = vadd.f32 %v1411, 1.0
          %v1413 = vrcp.pop %v1412
          %v1414 = vmul.f32 1.0, %v1413
          %v1415 = vmul.f32 %v1404, %v1414
          %1417 = vrot.lane.b32.xlu0 %v1404, 96
          %v1418 = vpop.permute.xlu0 %1417
          %v1420 = vmul.f32 %v1415, %v1418
          %v1421 = vpack.c.bf16 %v1420, %v1420
          %v1422 = vld [vmem:[#allocation15] sm:$0xf]
          %v1423 = vld [vmem:[#allocation15 + $0x4] sm:$0xf]
          %v1424 = vld [vmem:[#allocation15 + $0x8] sm:$0xf]
          %v1425 = vld [vmem:[#allocation15 + $0xc] sm:$0xf]
          %v1430 = vunpack.c.l.b16 %v1422
          %v1431 = vunpack.c.l.b16 %v1423
          %v1432 = vunpack.c.l.b16 %v1424
          %v1433 = vunpack.c.l.b16 %v1425
          %v1434 = vpack.c.b16 %v1431, %v1430
          %v1435 = vpack.c.b16 %v1433, %v1432
          %v1439 = vsel %vm1286, %v1421, 0
          %1441 = vmatprep.subr.bf16.mxu0 0
          %1442 = vmatpush1.bf16.msra.mxu0 %v1434
          %1443 = vmatprep.subr.bf16.mxu0 0
          %1444 = vmatpush1.bf16.msra.mxu0 %v1435
          %1445 = vmatprep.subr.bf16.mxu0 0
          %1446 = vmatpush1.bf16.msra.mxu0 0
          %1447 = vmatprep.subr.bf16.mxu0 0
          %1448 = vmatpush1.bf16.msra.mxu0 0
          %1449 = vmatprep.subr.bf16.mxu0 0
          %1450 = vmatpush1.bf16.msra.mxu0 0
          %1451 = vmatprep.subr.bf16.mxu0 0
          %1452 = vmatpush1.bf16.msra.mxu0 0
          %1453 = vmatprep.subr.bf16.mxu0 0
          %1454 = vmatpush1.bf16.msra.mxu0 0
          %1455 = vmatprep.subr.bf16.mxu0 0
          %1456 = vmatpush1.bf16.msra.mxu0 0
          %1457 = vmatprep.subr.bf16.mxu0 0
          %1458 = vmatpush1.bf16.msra.mxu0 0
          %1459 = vmatprep.subr.bf16.mxu0 0
          %1460 = vmatpush1.bf16.msra.mxu0 0
          %1461 = vmatprep.subr.bf16.mxu0 0
          %1462 = vmatpush1.bf16.msra.mxu0 0
          %1463 = vmatprep.subr.bf16.mxu0 0
          %1464 = vmatpush1.bf16.msra.mxu0 0
          %1465 = vmatprep.subr.bf16.mxu0 0
          %1466 = vmatpush1.bf16.msra.mxu0 0
          %1467 = vmatprep.subr.bf16.mxu0 0
          %1468 = vmatpush1.bf16.msra.mxu0 0
          %1469 = vmatprep.subr.bf16.mxu0 0
          %1470 = vmatpush1.bf16.msra.mxu0 0
          %1471 = vmatprep.subr.bf16.mxu0 0
          %1472 = vmatpush1.bf16.msra.mxu0 0
          %1473 = vmatprep.mubr.bf16.mxu0 0
          %1474 = vmatmul.mubr.bf16.gmra.mrb[0].mxu0 %v1439
          %v1475 = vpop.f32.mrb[0].mxu0
          %v1476 = vadd.f32 0.0, %v1475
          %v1477 = vpop.f32.mrb[0].mxu0
          %v1478 = vpop.f32.mrb[0].mxu0
          %v1479 = vpop.f32.mrb[0].mxu0
          %1480 = vdwg.mxu0
          %v1481 = vadd.f32 %v1331, %v1476
          %1482 = vst.msk [vmem:[%s469] sm:$0xff] %vm1286, %v1481
        $region92: #{tpu_custom_call.1} parent=55 // pred_fallthru
          _
        %s1483 = sand.u32 %s263, 1
        %s1484 = scalar_lea.sflag [#allocation8], %s1483
        %s1485 = sand.u32 %s263, 1
        %s1486 = smul.addr %s1485, 8
        %s1487 = scalar_lea.vmem [#allocation17], %s1486
        // Predicated region
        $region93: #{tpu_custom_call.1} parent=55 // pred_check
          %p1488 = pneg %p273
        $region94: #{tpu_custom_call.1} parent=55 // pred_check_branch
          %1490 = sbr.rel (%p1488) target = $region96
        $region95: #{tpu_custom_call.1} parent=55 // pred_region
          %s1492 = ssub.s32 128, 128
          %1493 = vsyncadd %s1484, %s1492
          %s1494 = sadd.s32 %s37, %s36
          %s1495 = smul.addr %s1494, 128
          %s1496 = scalar_lea.hbm %s9, %s1495
          %s1498 = sshll.u32 %s1487, 4
          %s1499 = int_to_ptr.vmem [resolvable:$true] %s1498
          %1501 = dma.vmem_to_hbm [thread:$0]  %s1499, 128, %s1496, %s1484
        $region96: #{tpu_custom_call.1} parent=55 // pred_fallthru
          _
      $region56: #{tpu_custom_call.1} parent=5 // pred_fallthru
        _
      %p1502 = scmp.le.s32.totalorder 2, %s26
      // Predicated region
      $region97: #{tpu_custom_call.1} parent=5 // pred_check
        %p1503 = pneg %p1502
      $region98: #{tpu_custom_call.1} parent=5 // pred_check_branch
        %1505 = sbr.rel (%p1503) target = $region100
      $region99: #{tpu_custom_call.1} parent=5 // pred_region
        %s1506 = ssub.s32 %s26, 2
        // Predicated region
        $region101: #{tpu_custom_call.1} parent=99 // pred_check
          %p1507 = pneg %p279
        $region102: #{tpu_custom_call.1} parent=99 // pred_check_branch
          %1509 = sbr.rel (%p1507) target = $region104
        $region103: #{tpu_custom_call.1} parent=99 // pred_region
          %s1510 = sand.u32 %s264, 1
          %s1511 = scalar_lea.sflag [#allocation8], %s1510
          %s1512 = sand.u32 %s264, 1
          %s1513 = smul.addr %s1512, 8
          %s1514 = scalar_lea.vmem [#allocation17], %s1513
          %1515 = dma.done %s1511, 128
        $region104: #{tpu_custom_call.1} parent=99 // pred_fallthru
          _
      $region100: #{tpu_custom_call.1} parent=5 // pred_fallthru
        _
    $region6: #{tpu_custom_call.1} parent=1 // loop_footer
      %s30 = sadd.s32 1, %s26
    $region7: #{tpu_custom_call.1} parent=1 // loop_footer_branch
      %25 = sbr.rel target = $region3
    $region8: #{tpu_custom_call.1} parent=1 // loop_exit
      _
    %1516 = vsyncpa [#allocation7], 1
    %s1517 = scalar_lea.sflag [#allocation7], 1
    %1518 = vsyncpa %s1517, 1
    %1519 = vsyncpa [#allocation10], 1
    %s1520 = scalar_lea.sflag [#allocation10], 1
    %1521 = vsyncpa %s1520, 1
    %1522 = vsyncpa [#allocation13], 1
    %1523 = vsyncpa [#allocation16], 1
    %1524 = vsyncpa [#allocation8], 1
    %s1525 = scalar_lea.sflag [#allocation8], 1
    %1526 = vsyncpa %s1525, 1

</llo_original>
